<compile_context>
chip_gen: v7x
topology: tpu7x:2x2x1
jax: 0.10.0
libtpu: 0.0.40
codegen_flags: <defaults>
</compile_context>

<pallas_src>
import functools

import jax
import jax.numpy as jnp
from jax import lax
from jax.experimental import pallas as pl
from jax.experimental.pallas import tpu as pltpu


# ----------------------------------------------------------------------------
# Pallas kernel: TB2 text items vs. ALL images per grid step
# ----------------------------------------------------------------------------
def _interaction_kernel(text_ref, wtext_ref, img_ref, out_ref, *, inv_temperature):
    # text_ref : [M, E]      M = TB2*S2 flattened text tokens (raw features)
    # wtext_ref: [M, E]      text tokens pre-scaled by mask / sum(mask)
    # img_ref  : [B1, S1, E] all image features (VMEM-resident, constant index)
    # out_ref  : [TB2, B1]   lane-dense output rows
    M, E = text_ref.shape
    B1, S1, _ = img_ref.shape
    TB2 = out_ref.shape[0]
    S2 = M // TB2

    txt = text_ref[...]                                   # [M, E]
    wtxt = wtext_ref[...]                                  # [M, E]
    img = img_ref[...]                                     # [B1, S1, E]
    img_flat = img.reshape(B1 * S1, E)                     # sublane-aligned collapse

    # Similarity logits in transposed layout: [B1*S1, M].  One big MXU matmul;
    # kept at HIGHEST because the sharp temperature amplifies error before exp.
    logits_t = lax.dot_general(
        img_flat, txt, (((1,), (1,)), ((), ())),
        preferred_element_type=jnp.float32,
        precision=lax.Precision.HIGHEST)
    scaled = (logits_t * jnp.float32(inv_temperature)).reshape(B1, S1, M)

    # Numerically-stable softmax *numerator* only: the denominator is dropped
    # because the subsequent L2 normalization cancels it exactly.
    mx = jnp.max(scaled, axis=1, keepdims=True)            # [B1, 1, M]
    ew = jnp.exp(scaled - mx)                               # [B1, S1, M]

    # Unnormalized attended image features: [B1, M, E].  bf16 operands with
    # f32 accumulation -- the result is L2-normalized, so bf16 is plenty and
    # halves the MXU passes vs. full-f32.
    attn = lax.dot_general(
        ew.astype(jnp.bfloat16), img.astype(jnp.bfloat16),
        (((1,), (1,)), ((0,), (0,))),
        preferred_element_type=jnp.float32)                 # [B1, M, E]

    # L2 normalization as a per-row scale: 1/max(||attn||,1e-12) == rsqrt(max(ssq,1e-24)).
    ssq = jnp.sum(attn * attn, axis=-1, keepdims=True)      # [B1, M, 1]
    inv_nrm = lax.rsqrt(jnp.maximum(ssq, jnp.float32(1e-24)))

    # Mask-weighted per-token similarity (mask/sum(mask) already folded into wtxt).
    wsim = jnp.sum(attn * wtxt[None, :, :], axis=-1) * inv_nrm[:, :, 0]   # [B1, M]

    # Segment-sum each text item's S2 tokens with a tiny block-diagonal matmul
    # (avoids lane-splitting reshapes/transposes); output is lane-dense [TB2, B1].
    tok = lax.broadcasted_iota(jnp.int32, (TB2, M), 1)
    lo = lax.broadcasted_iota(jnp.int32, (TB2, M), 0) * S2
    sel = ((tok >= lo) & (tok < lo + S2)).astype(jnp.float32)   # [TB2, M]
    out_ref[...] = lax.dot_general(
        sel, wsim, (((1,), (1,)), ((), ())),
        preferred_element_type=jnp.float32,
        precision=lax.Precision.HIGHEST)                     # [TB2, B1]


# ----------------------------------------------------------------------------
# Wrapper
# ----------------------------------------------------------------------------
def _pick_text_block(b2: int, s2: int) -> int:
    """Largest text block (divisor of b2) targeting ~256 matmul lanes, kept
    (8,128)-tileable for the text/out BlockSpecs."""
    target = max(1, 256 // max(s2, 1))
    for tb2 in range(min(b2, target), 0, -1):
        if b2 % tb2 == 0 and (tb2 == b2 or tb2 % 8 == 0):
            return tb2
    return b2


def interaction_model(image_features, text_features, text_masks,
                      *, softmax_temperature: float = 0.11):
    """image_features: [B1,S1,E], text_features: [B2,S2,E], text_masks: [B2,S2] -> [B2,B1]."""
    B1, S1, E = image_features.shape
    B2, S2, E2 = text_features.shape
    assert E == E2, "embedding dims must match"

    image_features = image_features.astype(jnp.float32)
    text_features = text_features.astype(jnp.float32)
    masks = text_masks.astype(jnp.float32)

    # Hoisted mask normalization: per-token weight = mask / sum(mask).
    # All-zero mask rows are guarded (output row becomes 0 instead of NaN).
    mask_sum = jnp.sum(masks, axis=-1, keepdims=True)
    weights = masks / jnp.where(mask_sum > 0, mask_sum, 1.0)

    tb2 = _pick_text_block(B2, S2)
    m_blk = tb2 * S2
    grid = (B2 // tb2,)

    # Flatten text tokens in the wrapper so the kernel sees lane-dense [M, E]
    # blocks with zero in-kernel text reshapes.
    text2d = text_features.reshape(B2 * S2, E)
    wtext2d = (text_features * weights[:, :, None]).reshape(B2 * S2, E)

    # VMEM budget: resident image (double-buffered by default) + pipelined text
    # blocks + intermediates + headroom; clamped to v7x's 64 MiB/TC.
    img_bytes = B1 * S1 * E * 4
    txt_bytes = m_blk * E * 4
    inter_bytes = 4 * (2 * B1 * S1 * m_blk + 2 * B1 * m_blk * E)
    vmem_limit = int(min(64 * 1024 * 1024,
                         max(16 * 1024 * 1024,
                             2 * img_bytes + 4 * txt_bytes + inter_bytes + (2 << 20))))

    kernel = functools.partial(_interaction_kernel,
                               inv_temperature=1.0 / softmax_temperature)

    return pl.pallas_call(
        kernel,
        out_shape=jax.ShapeDtypeStruct((B2, B1), jnp.float32),
        grid_spec=pltpu.PrefetchScalarGridSpec(
            num_scalar_prefetch=0,
            grid=grid,
            in_specs=[
                pl.BlockSpec((m_blk, E), lambda i: (i, 0)),      # raw text tokens
                pl.BlockSpec((m_blk, E), lambda i: (i, 0)),      # mask-weighted text tokens
                pl.BlockSpec((B1, S1, E), lambda i: (0, 0, 0)),  # all images (resident)
            ],
            out_specs=pl.BlockSpec((tb2, B1), lambda i: (i, 0)), # lane-dense rows
        ),
        compiler_params=pltpu.CompilerParams(
            dimension_semantics=("parallel",),                   # megacore over text blocks
            vmem_limit_bytes=vmem_limit,
        ),
    )(text2d, wtext2d, image_features)


# ----------------------------------------------------------------------------
# Pure-JAX f32 reference (mirrors the PyTorch forward)
# ----------------------------------------------------------------------------
def _reference(image_features, text_features, text_masks, temperature=0.11):
    img = image_features[None]                                   # [1, B1, S1, E]
    txt = text_features[:, None]                                 # [B2, 1, S2, E]
    logits = jnp.matmul(txt, jnp.swapaxes(img, -1, -2),
                        precision=lax.Precision.HIGHEST)         # [B2, B1, S2, S1]
    scores = jax.nn.softmax(logits / temperature, axis=-1)
    attn = jnp.matmul(scores, img,
                      precision=lax.Precision.HIGHEST)           # [B2, B1, S2, E]
    nrm = jnp.sqrt(jnp.sum(attn * attn, axis=-1, keepdims=True))
    attn_n = attn / jnp.maximum(nrm, 1e-12)
    sim = jnp.sum(txt * attn_n, axis=-1)                         # [B2, B1, S2]
    masked = text_masks[:, None, :] * sim                        # [B2, B1, S2]
    mask_num = jnp.sum(text_masks, axis=-1, keepdims=True)       # [B2, 1]
    return jnp.sum(masked, axis=-1) / mask_num                   # [B2, B1]


# ----------------------------------------------------------------------------
# Main
# ----------------------------------------------------------------------------
if __name__ == "__main__":
    B1, S1 = 2, 16      # image batch, image tokens
    B2, S2 = 2, 8       # text batch, text tokens
    E = 128             # embedding dim (lane-dense)

    key = jax.random.PRNGKey(0)
    k1, k2 = jax.random.split(key)
    image_features = jax.random.normal(k1, (B1, S1, E), dtype=jnp.float32)
    text_features = jax.random.normal(k2, (B2, S2, E), dtype=jnp.float32)
    lengths = jnp.array([S2, 5], dtype=jnp.int32)
    text_masks = (jnp.arange(S2)[None, :] < lengths[:, None]).astype(jnp.float32)

    out = interaction_model(image_features, text_features, text_masks)
    out = jax.block_until_ready(out)
    assert out.shape == (B2, B1), out.shape

    ref = _reference(image_features, text_features, text_masks)
    # The attended-feature matmul runs with bf16 operands (f32 accumulation)
    # per the perf guidance; worst-case deviation from the pure-f32 reference
    # at these shapes is ~2e-3, so compare at 5e-3.
    assert jnp.allclose(out, ref, atol=5e-3, rtol=5e-3), (out, ref)

    # Degenerate case: an all-zero text-mask row. The wrapper guard yields 0
    # for that row (PyTorch would divide by zero); other rows are unaffected.
    zero_masks = text_masks.at[1].set(0.0)
    out0 = jax.block_until_ready(
        interaction_model(image_features, text_features, zero_masks))
    ref0 = _reference(image_features, text_features, zero_masks)
    assert jnp.allclose(out0[0], ref0[0], atol=5e-3, rtol=5e-3), (out0, ref0)
    assert bool(jnp.all(jnp.isfinite(out0))) and jnp.allclose(out0[1], 0.0)

    print("KERNEL_OK")
</pallas_src>

<mosaic_0001>
module attributes {stable_mosaic.version = 11 : i64} {
  func.func @_interaction_kernel(%arg0: i32, %arg1: memref<16x128xf32, #tpu.memory_space<vmem>>, %arg2: memref<16x128xf32, #tpu.memory_space<vmem>>, %arg3: memref<2x16x128xf32, #tpu.memory_space<vmem>>, %arg4: memref<2x2xf32, #tpu.memory_space<vmem>>) attributes {dimension_semantics = [#tpu.dimension_semantics<parallel>], iteration_bounds = array<i64: 1>, scalar_prefetch = 0 : i64, scratch_operands = 0 : i64, tpu.core_type = #tpu.core_type<tc>, window_params = [{transform_indices = @transform_0, window_bounds = array<i64: 16, 128>}, {transform_indices = @transform_1, window_bounds = array<i64: 16, 128>}, {pipeline_mode = #tpu.pipeline_mode<synchronous>, transform_indices = @transform_2, window_bounds = array<i64: 2, 16, 128>}, {transform_indices = @transform_3, window_bounds = array<i64: 2, 2>}]} {
    %c0 = arith.constant 0 : index
    %c0_0 = arith.constant 0 : index
    %0 = vector.load %arg1[%c0, %c0_0] : memref<16x128xf32, #tpu.memory_space<vmem>>, vector<16x128xf32>
    %c0_1 = arith.constant 0 : index
    %c0_2 = arith.constant 0 : index
    %1 = vector.load %arg2[%c0_1, %c0_2] : memref<16x128xf32, #tpu.memory_space<vmem>>, vector<16x128xf32>
    %c0_3 = arith.constant 0 : index
    %c0_4 = arith.constant 0 : index
    %c0_5 = arith.constant 0 : index
    %2 = vector.load %arg3[%c0_3, %c0_4, %c0_5] : memref<2x16x128xf32, #tpu.memory_space<vmem>>, vector<2x16x128xf32>
    %3 = vector.shape_cast %2 : vector<2x16x128xf32> to vector<32x128xf32>
    %cst = arith.constant dense<0.000000e+00> : vector<32x16xf32>
    %4 = tpu.matmul %3, %0, %cst {dimension_numbers = #tpu.dot_dimension_numbers<[1], [1], [0], [0], [0, 0, 1, 0], [], []>, precision = #tpu.contract_precision<fp32>} : vector<32x128xf32>, vector<16x128xf32>, vector<32x16xf32> -> vector<32x16xf32>
    %cst_6 = arith.constant 9.090909 : f32
    %5 = vector.broadcast %cst_6 : f32 to vector<32x16xf32>
    %6 = arith.mulf %4, %5 : vector<32x16xf32>
    %7 = vector.shape_cast %6 : vector<32x16xf32> to vector<2x16x16xf32>
    %cst_7 = arith.constant dense<0xFF800000> : vector<2x16xf32>
    %8 = vector.multi_reduction <maximumf>, %7, %cst_7 [1] : vector<2x16x16xf32> to vector<2x16xf32>
    %9 = vector.shape_cast %8 : vector<2x16xf32> to vector<2x1x16xf32>
    %10 = vector.broadcast %9 : vector<2x1x16xf32> to vector<2x16x16xf32>
    %11 = arith.subf %7, %10 : vector<2x16x16xf32>
    %12 = math.exp %11 : vector<2x16x16xf32>
    %13 = arith.truncf %12 : vector<2x16x16xf32> to vector<2x16x16xbf16>
    %14 = arith.truncf %2 : vector<2x16x128xf32> to vector<2x16x128xbf16>
    %cst_8 = arith.constant dense<0.000000e+00> : vector<2x16x128xf32>
    %15 = tpu.matmul %13, %14, %cst_8 {dimension_numbers = #tpu.dot_dimension_numbers<[1], [1], [2], [2], [0, 0, 0, 2, 1, 2], [0], [0]>} : vector<2x16x16xbf16>, vector<2x16x128xbf16>, vector<2x16x128xf32> -> vector<2x16x128xf32>
    %16 = arith.mulf %15, %15 : vector<2x16x128xf32>
    %cst_9 = arith.constant dense<0.000000e+00> : vector<2x16xf32>
    %17 = vector.multi_reduction <add>, %16, %cst_9 [2] : vector<2x16x128xf32> to vector<2x16xf32>
    %18 = vector.shape_cast %17 : vector<2x16xf32> to vector<2x16x1xf32>
    %cst_10 = arith.constant 1.000000e-24 : f32
    %19 = vector.broadcast %cst_10 : f32 to vector<2x16x1xf32>
    %20 = arith.maximumf %18, %19 : vector<2x16x1xf32>
    %21 = math.rsqrt %20 : vector<2x16x1xf32>
    %22 = vector.shape_cast %1 : vector<16x128xf32> to vector<1x16x128xf32>
    %23 = vector.broadcast %22 : vector<1x16x128xf32> to vector<2x16x128xf32>
    %24 = arith.mulf %15, %23 : vector<2x16x128xf32>
    %cst_11 = arith.constant dense<0.000000e+00> : vector<2x16xf32>
    %25 = vector.multi_reduction <add>, %24, %cst_11 [2] : vector<2x16x128xf32> to vector<2x16xf32>
    %26 = vector.shape_cast %21 : vector<2x16x1xf32> to vector<2x16xf32>
    %27 = arith.mulf %25, %26 : vector<2x16xf32>
    %28 = tpu.iota {dimensions = array<i32: 1>} : vector<2x16xi32>
    %29 = tpu.iota {dimensions = array<i32: 0>} : vector<2x16xi32>
    %c8_i32 = arith.constant 8 : i32
    %30 = vector.broadcast %c8_i32 : i32 to vector<2x16xi32>
    %31 = arith.muli %29, %30 : vector<2x16xi32>
    %32 = arith.cmpi sge, %28, %31 : vector<2x16xi32>
    %c8_i32_12 = arith.constant 8 : i32
    %33 = vector.broadcast %c8_i32_12 : i32 to vector<2x16xi32>
    %34 = arith.addi %31, %33 : vector<2x16xi32>
    %35 = arith.cmpi slt, %28, %34 : vector<2x16xi32>
    %36 = arith.andi %32, %35 : vector<2x16xi1>
    %37 = arith.extui %36 : vector<2x16xi1> to vector<2x16xi32>
    %38 = arith.sitofp %37 : vector<2x16xi32> to vector<2x16xf32>
    %cst_13 = arith.constant dense<0.000000e+00> : vector<2x2xf32>
    %39 = tpu.matmul %38, %27, %cst_13 {dimension_numbers = #tpu.dot_dimension_numbers<[1], [1], [0], [0], [0, 0, 1, 0], [], []>, precision = #tpu.contract_precision<fp32>} : vector<2x16xf32>, vector<2x16xf32>, vector<2x2xf32> -> vector<2x2xf32>
    %c0_14 = arith.constant 0 : index
    %c0_15 = arith.constant 0 : index
    %40 = vector.load %arg4[%c0_14, %c0_15] : memref<2x2xf32, #tpu.memory_space<vmem>>, vector<2x2xf32>
    tpu.vector_store %arg4[%c0_14, %c0_15], %39 {strides = array<i32>} : memref<2x2xf32, #tpu.memory_space<vmem>>, vector<2x2xf32>,
    return
  }
  func.func @transform_0(%arg0: i32) -> (i32, i32) {
    %c0_i32 = arith.constant 0 : i32
    %c0_i32_0 = arith.constant 0 : i32
    return %arg0, %c0_i32 : i32, i32
  }
  func.func @transform_1(%arg0: i32) -> (i32, i32) {
    %c0_i32 = arith.constant 0 : i32
    %c0_i32_0 = arith.constant 0 : i32
    return %arg0, %c0_i32 : i32, i32
  }
  func.func @transform_2(%arg0: i32) -> (i32, i32, i32) {
    %c0_i32 = arith.constant 0 : i32
    %c0_i32_0 = arith.constant 0 : i32
    %c0_i32_1 = arith.constant 0 : i32
    %c0_i32_2 = arith.constant 0 : i32
    return %c0_i32, %c0_i32_0, %c0_i32_1 : i32, i32, i32
  }
  func.func @transform_3(%arg0: i32) -> (i32, i32) {
    %c0_i32 = arith.constant 0 : i32
    %c0_i32_0 = arith.constant 0 : i32
    return %arg0, %c0_i32 : i32, i32
  }
}

</mosaic_0001>

<llo_original>
// kernel: tpu_custom_call.1
$region0: #{tpu_custom_call.1}
  #allocation0 [shape = 'u32[]', space=smem, size = 0x4, offset = 0x4, fixed_abs, tag = 'smem constant byte address 0x4 - core index']
  #allocation1 [shape = 'u32[144,128]{1,0:T(1,128)}', space=vmem, size = 0x12000, scoped, tag = 'internal scratch']
  %s0 = inlined_call_operand.hbm [shape: f32[16,128], index: 0, kind: input, shape index: {}]
  %s1 = inlined_call_operand.hbm [shape: f32[16,128], index: 1, kind: input, shape index: {}]
  %s2 = inlined_call_operand.hbm [shape: f32[2,16,128], index: 2, kind: input, shape index: {}]
  %s3 = inlined_call_operand.hbm [shape: f32[2,2], index: 3, kind: output, shape index: {}]
  %s4 = sld [smem:[#allocation0]]
  $region34: #{tpu_custom_call.1} parent=0
    _
  %s6 = ssub.s32 1, %s4
  %s7 = scalar_select 0, %s6, %s4
  $region1: #{tpu_custom_call.1} parent=0
    #allocation2 [shape = 'u8[8192]{0}', space=vmem, size = 0x2000, scoped, tag = 'input window, operand 0, single buffered']
    #allocation3 [shape = 's32[1]{0}', space=sflag, size = 0x4, scoped, tag = 'scoped memory for tpu_custom_call.1']
    #allocation4 [shape = 's32[1]{0}', space=sflag, size = 0x4, scoped, tag = 'scoped memory for tpu_custom_call.1']
    #allocation5 [shape = 'u8[8192]{0}', space=vmem, size = 0x2000, scoped, tag = 'input window, operand 1, single buffered']
    #allocation6 [shape = 's32[1]{0}', space=sflag, size = 0x4, scoped, tag = 'scoped memory for tpu_custom_call.1']
    #allocation7 [shape = 'u8[16384]{0}', space=vmem, size = 0x4000, scoped, tag = 'input window, operand 2, single buffered']
    #allocation8 [shape = 'u8[1024]{0}', space=vmem, size = 0x400, scoped, tag = 'output window, operand 0, single buffered']
    %8 = vsyncpa [#allocation3], 0
    %9 = vsyncpa [#allocation6], 0
    %10 = vsyncpa [#allocation4], 0
    // Predicated region
    $region2: #{tpu_custom_call.1} parent=1 // pred_check
      _
    $region3: #{tpu_custom_call.1} parent=1 // pred_check_branch
      %12 = sbr.rel (0) target = $region5
    $region4: #{tpu_custom_call.1} parent=1 // pred_region
      %s14 = ssub.s32 256, 256
      %15 = vsyncadd [#allocation3], %s14
      %s16 = sshll.u32 [#allocation2], 4
      %s17 = int_to_ptr.vmem [resolvable:$true] %s16
      %22 = dma.hbm_to_vmem [thread:$0]  %s0, 256, %s17, [#allocation3], 128, 128, 8
    $region5: #{tpu_custom_call.1} parent=1 // pred_fallthru
      _
    // Predicated region
    $region6: #{tpu_custom_call.1} parent=1 // pred_check
      _
    $region7: #{tpu_custom_call.1} parent=1 // pred_check_branch
      %24 = sbr.rel (0) target = $region9
    $region8: #{tpu_custom_call.1} parent=1 // pred_region
      %s26 = ssub.s32 256, 256
      %27 = vsyncadd [#allocation6], %s26
      %s28 = sshll.u32 [#allocation5], 4
      %s29 = int_to_ptr.vmem [resolvable:$true] %s28
      %34 = dma.hbm_to_vmem [thread:$0]  %s1, 256, %s29, [#allocation6], 128, 128, 8
    $region9: #{tpu_custom_call.1} parent=1 // pred_fallthru
      _
    // Predicated region
    $region10: #{tpu_custom_call.1} parent=1 // pred_check
      _
    $region11: #{tpu_custom_call.1} parent=1 // pred_check_branch
      %36 = sbr.rel (0) target = $region13
    $region12: #{tpu_custom_call.1} parent=1 // pred_region
      %s38 = ssub.s32 512, 512
      %39 = vsyncadd [#allocation6], %s38
      %s40 = sshll.u32 [#allocation7], 4
      %s41 = int_to_ptr.vmem [resolvable:$true] %s40
      %46 = dma.hbm_to_vmem [thread:$0]  %s2, 512, %s41, [#allocation6], 128, 128, 8
    $region13: #{tpu_custom_call.1} parent=1 // pred_fallthru
      _
    // Predicated region
    $region14: #{tpu_custom_call.1} parent=1 // pred_check
      _
    $region15: #{tpu_custom_call.1} parent=1 // pred_check_branch
      %48 = sbr.rel (0) target = $region17
    $region16: #{tpu_custom_call.1} parent=1 // pred_region
      %49 = dma.done [#allocation3], 256
    $region17: #{tpu_custom_call.1} parent=1 // pred_fallthru
      _
    // Predicated region
    $region18: #{tpu_custom_call.1} parent=1 // pred_check
      _
    $region19: #{tpu_custom_call.1} parent=1 // pred_check_branch
      %51 = sbr.rel (0) target = $region21
    $region20: #{tpu_custom_call.1} parent=1 // pred_region
      %52 = dma.done [#allocation6], 256
    $region21: #{tpu_custom_call.1} parent=1 // pred_fallthru
      _
    // Predicated region
    $region22: #{tpu_custom_call.1} parent=1 // pred_check
      _
    $region23: #{tpu_custom_call.1} parent=1 // pred_check_branch
      %54 = sbr.rel (0) target = $region25
    $region24: #{tpu_custom_call.1} parent=1 // pred_region
      %55 = dma.done [#allocation6], 512
    $region25: #{tpu_custom_call.1} parent=1 // pred_fallthru
      _
    %v57 = vld [vmem:[#allocation2] sm:$0xff]
    %v58 = vld [vmem:[#allocation2 + $0x8] sm:$0xff]
    %v59 = vld [vmem:[#allocation5] sm:$0xff]
    %v60 = vld [vmem:[#allocation5 + $0x8] sm:$0xff]
    %v61 = vld [vmem:[#allocation7] sm:$0xff]
    %v62 = vld [vmem:[#allocation7 + $0x8] sm:$0xff]
    %v63 = vld [vmem:[#allocation7 + $0x10] sm:$0xff]
    %v64 = vld [vmem:[#allocation7 + $0x18] sm:$0xff]
    %65 = vmatprep.subr.mxu0 0.0
    %v66 = vand.u32 %v57, 4294901760
    %67 = vmatpush1.xpose.msra.mxu0 %v66
    %68 = vmatprep.subr.mxu0 0.0
    %v69 = vand.u32 %v58, 4294901760
    %70 = vmatpush1.xpose.msra.mxu0 %v69
    %71 = vmatprep.subr.mxu0 0.0
    %72 = vmatpush1.xpose.msra.mxu0 0.0
    %73 = vmatprep.subr.mxu0 0.0
    %74 = vmatpush1.xpose.msra.mxu0 0.0
    %75 = vmatprep.subr.mxu0 0.0
    %76 = vmatpush1.xpose.msra.mxu0 0.0
    %77 = vmatprep.subr.mxu0 0.0
    %78 = vmatpush1.xpose.msra.mxu0 0.0
    %79 = vmatprep.subr.mxu0 0.0
    %80 = vmatpush1.xpose.msra.mxu0 0.0
    %81 = vmatprep.subr.mxu0 0.0
    %82 = vmatpush1.xpose.msra.mxu0 0.0
    %83 = vmatprep.subr.mxu0 0.0
    %84 = vmatpush1.xpose.msra.mxu0 0.0
    %85 = vmatprep.subr.mxu0 0.0
    %86 = vmatpush1.xpose.msra.mxu0 0.0
    %87 = vmatprep.subr.mxu0 0.0
    %88 = vmatpush1.xpose.msra.mxu0 0.0
    %89 = vmatprep.subr.mxu0 0.0
    %90 = vmatpush1.xpose.msra.mxu0 0.0
    %91 = vmatprep.subr.mxu0 0.0
    %92 = vmatpush1.xpose.msra.mxu0 0.0
    %93 = vmatprep.subr.mxu0 0.0
    %94 = vmatpush1.xpose.msra.mxu0 0.0
    %95 = vmatprep.subr.mxu0 0.0
    %96 = vmatpush1.xpose.msra.mxu0 0.0
    %97 = vmatprep.subr.mxu0 0.0
    %98 = vmatpush1.xpose.msra.mxu0 0.0
    %99 = vmatprep.subr.mxu0 0.0
    %100 = vmatpush1.xpose.msra.mxu0 0.0
    %101 = vmatprep.subr.mxu0 0.0
    %102 = vmatpush1.xpose.msra.mxu0 0.0
    %103 = vmatprep.subr.mxu0 0.0
    %104 = vmatpush1.xpose.msra.mxu0 0.0
    %105 = vmatprep.subr.mxu0 0.0
    %106 = vmatpush1.xpose.msra.mxu0 0.0
    %107 = vmatprep.subr.mxu0 0.0
    %108 = vmatpush1.xpose.msra.mxu0 0.0
    %109 = vmatprep.subr.mxu0 0.0
    %110 = vmatpush1.xpose.msra.mxu0 0.0
    %111 = vmatprep.subr.mxu0 0.0
    %112 = vmatpush1.xpose.msra.mxu0 0.0
    %113 = vmatprep.subr.mxu0 0.0
    %114 = vmatpush1.xpose.msra.mxu0 0.0
    %115 = vmatprep.subr.mxu0 0.0
    %116 = vmatpush1.xpose.msra.mxu0 0.0
    %117 = vmatprep.subr.mxu0 0.0
    %118 = vmatpush1.xpose.msra.mxu0 0.0
    %119 = vmatprep.subr.mxu0 0.0
    %120 = vmatpush1.xpose.msra.mxu0 0.0
    %121 = vmatprep.subr.mxu0 0.0
    %122 = vmatpush1.xpose.msra.mxu0 0.0
    %123 = vmatprep.subr.mxu0 0.0
    %124 = vmatpush1.xpose.msra.mxu0 0.0
    %125 = vmatprep.subr.mxu0 0.0
    %126 = vmatpush1.xpose.msra.mxu0 0.0
    %127 = vmatprep.subr.mxu0 0.0
    %128 = vmatpush1.xpose.msra.mxu0 0.0
    %129 = vmatprep.subr.mxu0 0.0
    %130 = vmatpush1.xpose.msra.mxu0 0.0
    %131 = vmatprep.mubr.f32.mxu0 0.0
    %v132 = vand.u32 %v61, 4294901760
    %v133 = vsub.f32 %v61, %v132
    %v134 = vand.u32 %v133, 4294901760
    %v135 = vsub.f32 %v133, %v134
    %v136 = vand.u32 %v135, 4294901760
    %137 = vmatmul.mubr.f32.gmra.mrb[0].mxu0 %v136
    %v138 = vpop.f32.mrb[0].mxu0
    %v139 = vadd.f32 0.0, %v138
    %v140 = vpop.f32.mrb[0].mxu0
    %141 = vmatprep.mubr.f32.mxu0 0.0
    %v142 = vand.u32 %v62, 4294901760
    %v143 = vsub.f32 %v62, %v142
    %v144 = vand.u32 %v143, 4294901760
    %v145 = vsub.f32 %v143, %v144
    %v146 = vand.u32 %v145, 4294901760
    %147 = vmatmul.mubr.f32.gmra.mrb[0].mxu0 %v146
    %v148 = vpop.f32.mrb[0].mxu0
    %v149 = vadd.f32 0.0, %v148
    %v150 = vpop.f32.mrb[0].mxu0
    %151 = vmatprep.mubr.f32.mxu0 0.0
    %v152 = vand.u32 %v63, 4294901760
    %v153 = vsub.f32 %v63, %v152
    %v154 = vand.u32 %v153, 4294901760
    %v155 = vsub.f32 %v153, %v154
    %v156 = vand.u32 %v155, 4294901760
    %157 = vmatmul.mubr.f32.gmra.mrb[0].mxu0 %v156
    %v158 = vpop.f32.mrb[0].mxu0
    %v159 = vadd.f32 0.0, %v158
    %v160 = vpop.f32.mrb[0].mxu0
    %161 = vmatprep.mubr.f32.mxu0 0.0
    %v162 = vand.u32 %v64, 4294901760
    %v163 = vsub.f32 %v64, %v162
    %v164 = vand.u32 %v163, 4294901760
    %v165 = vsub.f32 %v163, %v164
    %v166 = vand.u32 %v165, 4294901760
    %167 = vmatmul.mubr.f32.gmra.mrb[0].mxu0 %v166
    %v168 = vpop.f32.mrb[0].mxu0
    %v169 = vadd.f32 0.0, %v168
    %v170 = vpop.f32.mrb[0].mxu0
    %171 = vdwg.mxu0
    %172 = vmatprep.subr.mxu0 0.0
    %v173 = vand.u32 %v57, 4294901760
    %v174 = vsub.f32 %v57, %v173
    %v175 = vand.u32 %v174, 4294901760
    %v176 = vsub.f32 %v174, %v175
    %v177 = vand.u32 %v176, 4294901760
    %178 = vmatpush1.xpose.msra.mxu0 %v177
    %179 = vmatprep.subr.mxu0 0.0
    %v180 = vand.u32 %v58, 4294901760
    %v181 = vsub.f32 %v58, %v180
    %v182 = vand.u32 %v181, 4294901760
    %v183 = vsub.f32 %v181, %v182
    %v184 = vand.u32 %v183, 4294901760
    %185 = vmatpush1.xpose.msra.mxu0 %v184
    %186 = vmatprep.subr.mxu0 0.0
    %187 = vmatpush1.xpose.msra.mxu0 0.0
    %188 = vmatprep.subr.mxu0 0.0
    %189 = vmatpush1.xpose.msra.mxu0 0.0
    %190 = vmatprep.subr.mxu0 0.0
    %191 = vmatpush1.xpose.msra.mxu0 0.0
    %192 = vmatprep.subr.mxu0 0.0
    %193 = vmatpush1.xpose.msra.mxu0 0.0
    %194 = vmatprep.subr.mxu0 0.0
    %195 = vmatpush1.xpose.msra.mxu0 0.0
    %196 = vmatprep.subr.mxu0 0.0
    %197 = vmatpush1.xpose.msra.mxu0 0.0
    %198 = vmatprep.subr.mxu0 0.0
    %199 = vmatpush1.xpose.msra.mxu0 0.0
    %200 = vmatprep.subr.mxu0 0.0
    %201 = vmatpush1.xpose.msra.mxu0 0.0
    %202 = vmatprep.subr.mxu0 0.0
    %203 = vmatpush1.xpose.msra.mxu0 0.0
    %204 = vmatprep.subr.mxu0 0.0
    %205 = vmatpush1.xpose.msra.mxu0 0.0
    %206 = vmatprep.subr.mxu0 0.0
    %207 = vmatpush1.xpose.msra.mxu0 0.0
    %208 = vmatprep.subr.mxu0 0.0
    %209 = vmatpush1.xpose.msra.mxu0 0.0
    %210 = vmatprep.subr.mxu0 0.0
    %211 = vmatpush1.xpose.msra.mxu0 0.0
    %212 = vmatprep.subr.mxu0 0.0
    %213 = vmatpush1.xpose.msra.mxu0 0.0
    %214 = vmatprep.subr.mxu0 0.0
    %215 = vmatpush1.xpose.msra.mxu0 0.0
    %216 = vmatprep.subr.mxu0 0.0
    %217 = vmatpush1.xpose.msra.mxu0 0.0
    %218 = vmatprep.subr.mxu0 0.0
    %219 = vmatpush1.xpose.msra.mxu0 0.0
    %220 = vmatprep.subr.mxu0 0.0
    %221 = vmatpush1.xpose.msra.mxu0 0.0
    %222 = vmatprep.subr.mxu0 0.0
    %223 = vmatpush1.xpose.msra.mxu0 0.0
    %224 = vmatprep.subr.mxu0 0.0
    %225 = vmatpush1.xpose.msra.mxu0 0.0
    %226 = vmatprep.subr.mxu0 0.0
    %227 = vmatpush1.xpose.msra.mxu0 0.0
    %228 = vmatprep.subr.mxu0 0.0
    %229 = vmatpush1.xpose.msra.mxu0 0.0
    %230 = vmatprep.subr.mxu0 0.0
    %231 = vmatpush1.xpose.msra.mxu0 0.0
    %232 = vmatprep.subr.mxu0 0.0
    %233 = vmatpush1.xpose.msra.mxu0 0.0
    %234 = vmatprep.subr.mxu0 0.0
    %235 = vmatpush1.xpose.msra.mxu0 0.0
    %236 = vmatprep.subr.mxu0 0.0
    %237 = vmatpush1.xpose.msra.mxu0 0.0
    %238 = vmatprep.subr.mxu0 0.0
    %239 = vmatpush1.xpose.msra.mxu0 0.0
    %240 = vmatprep.subr.mxu0 0.0
    %241 = vmatpush1.xpose.msra.mxu0 0.0
    %242 = vmatprep.subr.mxu0 0.0
    %243 = vmatpush1.xpose.msra.mxu0 0.0
    %244 = vmatprep.subr.mxu0 0.0
    %245 = vmatpush1.xpose.msra.mxu0 0.0
    %246 = vmatprep.mubr.f32.mxu0 0.0
    %v247 = vand.u32 %v61, 4294901760
    %248 = vmatmul.mubr.f32.gmra.mrb[0].mxu0 %v247
    %v249 = vpop.f32.mrb[0].mxu0
    %v250 = vadd.f32 %v139, %v249
    %v251 = vpop.f32.mrb[0].mxu0
    %252 = vmatprep.mubr.f32.mxu0 0.0
    %v253 = vand.u32 %v62, 4294901760
    %254 = vmatmul.mubr.f32.gmra.mrb[0].mxu0 %v253
    %v255 = vpop.f32.mrb[0].mxu0
    %v256 = vadd.f32 %v149, %v255
    %v257 = vpop.f32.mrb[0].mxu0
    %258 = vmatprep.mubr.f32.mxu0 0.0
    %v259 = vand.u32 %v63, 4294901760
    %260 = vmatmul.mubr.f32.gmra.mrb[0].mxu0 %v259
    %v261 = vpop.f32.mrb[0].mxu0
    %v262 = vadd.f32 %v159, %v261
    %v263 = vpop.f32.mrb[0].mxu0
    %264 = vmatprep.mubr.f32.mxu0 0.0
    %v265 = vand.u32 %v64, 4294901760
    %266 = vmatmul.mubr.f32.gmra.mrb[0].mxu0 %v265
    %v267 = vpop.f32.mrb[0].mxu0
    %v268 = vadd.f32 %v169, %v267
    %v269 = vpop.f32.mrb[0].mxu0
    %270 = vdwg.mxu0
    %271 = vmatprep.subr.mxu0 0.0
    %v272 = vand.u32 %v57, 4294901760
    %v273 = vsub.f32 %v57, %v272
    %274 = vmatpush1.xpose.msra.mxu0 %v273
    %275 = vmatprep.subr.mxu0 0.0
    %v276 = vand.u32 %v58, 4294901760
    %v277 = vsub.f32 %v58, %v276
    %278 = vmatpush1.xpose.msra.mxu0 %v277
    %279 = vmatprep.subr.mxu0 0.0
    %280 = vmatpush1.xpose.msra.mxu0 0.0
    %281 = vmatprep.subr.mxu0 0.0
    %282 = vmatpush1.xpose.msra.mxu0 0.0
    %283 = vmatprep.subr.mxu0 0.0
    %284 = vmatpush1.xpose.msra.mxu0 0.0
    %285 = vmatprep.subr.mxu0 0.0
    %286 = vmatpush1.xpose.msra.mxu0 0.0
    %287 = vmatprep.subr.mxu0 0.0
    %288 = vmatpush1.xpose.msra.mxu0 0.0
    %289 = vmatprep.subr.mxu0 0.0
    %290 = vmatpush1.xpose.msra.mxu0 0.0
    %291 = vmatprep.subr.mxu0 0.0
    %292 = vmatpush1.xpose.msra.mxu0 0.0
    %293 = vmatprep.subr.mxu0 0.0
    %294 = vmatpush1.xpose.msra.mxu0 0.0
    %295 = vmatprep.subr.mxu0 0.0
    %296 = vmatpush1.xpose.msra.mxu0 0.0
    %297 = vmatprep.subr.mxu0 0.0
    %298 = vmatpush1.xpose.msra.mxu0 0.0
    %299 = vmatprep.subr.mxu0 0.0
    %300 = vmatpush1.xpose.msra.mxu0 0.0
    %301 = vmatprep.subr.mxu0 0.0
    %302 = vmatpush1.xpose.msra.mxu0 0.0
    %303 = vmatprep.subr.mxu0 0.0
    %304 = vmatpush1.xpose.msra.mxu0 0.0
    %305 = vmatprep.subr.mxu0 0.0
    %306 = vmatpush1.xpose.msra.mxu0 0.0
    %307 = vmatprep.subr.mxu0 0.0
    %308 = vmatpush1.xpose.msra.mxu0 0.0
    %309 = vmatprep.subr.mxu0 0.0
    %310 = vmatpush1.xpose.msra.mxu0 0.0
    %311 = vmatprep.subr.mxu0 0.0
    %312 = vmatpush1.xpose.msra.mxu0 0.0
    %313 = vmatprep.subr.mxu0 0.0
    %314 = vmatpush1.xpose.msra.mxu0 0.0
    %315 = vmatprep.subr.mxu0 0.0
    %316 = vmatpush1.xpose.msra.mxu0 0.0
    %317 = vmatprep.subr.mxu0 0.0
    %318 = vmatpush1.xpose.msra.mxu0 0.0
    %319 = vmatprep.subr.mxu0 0.0
    %320 = vmatpush1.xpose.msra.mxu0 0.0
    %321 = vmatprep.subr.mxu0 0.0
    %322 = vmatpush1.xpose.msra.mxu0 0.0
    %323 = vmatprep.subr.mxu0 0.0
    %324 = vmatpush1.xpose.msra.mxu0 0.0
    %325 = vmatprep.subr.mxu0 0.0
    %326 = vmatpush1.xpose.msra.mxu0 0.0
    %327 = vmatprep.subr.mxu0 0.0
    %328 = vmatpush1.xpose.msra.mxu0 0.0
    %329 = vmatprep.subr.mxu0 0.0
    %330 = vmatpush1.xpose.msra.mxu0 0.0
    %331 = vmatprep.subr.mxu0 0.0
    %332 = vmatpush1.xpose.msra.mxu0 0.0
    %333 = vmatprep.subr.mxu0 0.0
    %334 = vmatpush1.xpose.msra.mxu0 0.0
    %335 = vmatprep.subr.mxu0 0.0
    %336 = vmatpush1.xpose.msra.mxu0 0.0
    %337 = vmatprep.subr.mxu0 0.0
    %338 = vmatpush1.xpose.msra.mxu0 0.0
    %339 = vmatprep.mubr.f32.mxu0 0.0
    %v340 = vand.u32 %v61, 4294901760
    %v341 = vsub.f32 %v61, %v340
    %342 = vmatmul.mubr.f32.gmra.mrb[0].mxu0 %v341
    %v343 = vpop.f32.mrb[0].mxu0
    %v344 = vadd.f32 %v250, %v343
    %v345 = vpop.f32.mrb[0].mxu0
    %346 = vmatprep.mubr.f32.mxu0 0.0
    %v347 = vand.u32 %v62, 4294901760
    %v348 = vsub.f32 %v62, %v347
    %349 = vmatmul.mubr.f32.gmra.mrb[0].mxu0 %v348
    %v350 = vpop.f32.mrb[0].mxu0
    %v351 = vadd.f32 %v256, %v350
    %v352 = vpop.f32.mrb[0].mxu0
    %353 = vmatprep.mubr.f32.mxu0 0.0
    %v354 = vand.u32 %v63, 4294901760
    %v355 = vsub.f32 %v63, %v354
    %356 = vmatmul.mubr.f32.gmra.mrb[0].mxu0 %v355
    %v357 = vpop.f32.mrb[0].mxu0
    %v358 = vadd.f32 %v262, %v357
    %v359 = vpop.f32.mrb[0].mxu0
    %360 = vmatprep.mubr.f32.mxu0 0.0
    %v361 = vand.u32 %v64, 4294901760
    %v362 = vsub.f32 %v64, %v361
    %363 = vmatmul.mubr.f32.gmra.mrb[0].mxu0 %v362
    %v364 = vpop.f32.mrb[0].mxu0
    %v365 = vadd.f32 %v268, %v364
    %v366 = vpop.f32.mrb[0].mxu0
    %367 = vdwg.mxu0
    %368 = vmatprep.subr.mxu0 0.0
    %v369 = vand.u32 %v57, 4294901760
    %370 = vmatpush1.xpose.msra.mxu0 %v369
    %371 = vmatprep.subr.mxu0 0.0
    %v372 = vand.u32 %v58, 4294901760
    %373 = vmatpush1.xpose.msra.mxu0 %v372
    %374 = vmatprep.subr.mxu0 0.0
    %375 = vmatpush1.xpose.msra.mxu0 0.0
    %376 = vmatprep.subr.mxu0 0.0
    %377 = vmatpush1.xpose.msra.mxu0 0.0
    %378 = vmatprep.subr.mxu0 0.0
    %379 = vmatpush1.xpose.msra.mxu0 0.0
    %380 = vmatprep.subr.mxu0 0.0
    %381 = vmatpush1.xpose.msra.mxu0 0.0
    %382 = vmatprep.subr.mxu0 0.0
    %383 = vmatpush1.xpose.msra.mxu0 0.0
    %384 = vmatprep.subr.mxu0 0.0
    %385 = vmatpush1.xpose.msra.mxu0 0.0
    %386 = vmatprep.subr.mxu0 0.0
    %387 = vmatpush1.xpose.msra.mxu0 0.0
    %388 = vmatprep.subr.mxu0 0.0
    %389 = vmatpush1.xpose.msra.mxu0 0.0
    %390 = vmatprep.subr.mxu0 0.0
    %391 = vmatpush1.xpose.msra.mxu0 0.0
    %392 = vmatprep.subr.mxu0 0.0
    %393 = vmatpush1.xpose.msra.mxu0 0.0
    %394 = vmatprep.subr.mxu0 0.0
    %395 = vmatpush1.xpose.msra.mxu0 0.0
    %396 = vmatprep.subr.mxu0 0.0
    %397 = vmatpush1.xpose.msra.mxu0 0.0
    %398 = vmatprep.subr.mxu0 0.0
    %399 = vmatpush1.xpose.msra.mxu0 0.0
    %400 = vmatprep.subr.mxu0 0.0
    %401 = vmatpush1.xpose.msra.mxu0 0.0
    %402 = vmatprep.subr.mxu0 0.0
    %403 = vmatpush1.xpose.msra.mxu0 0.0
    %404 = vmatprep.subr.mxu0 0.0
    %405 = vmatpush1.xpose.msra.mxu0 0.0
    %406 = vmatprep.subr.mxu0 0.0
    %407 = vmatpush1.xpose.msra.mxu0 0.0
    %408 = vmatprep.subr.mxu0 0.0
    %409 = vmatpush1.xpose.msra.mxu0 0.0
    %410 = vmatprep.subr.mxu0 0.0
    %411 = vmatpush1.xpose.msra.mxu0 0.0
    %412 = vmatprep.subr.mxu0 0.0
    %413 = vmatpush1.xpose.msra.mxu0 0.0
    %414 = vmatprep.subr.mxu0 0.0
    %415 = vmatpush1.xpose.msra.mxu0 0.0
    %416 = vmatprep.subr.mxu0 0.0
    %417 = vmatpush1.xpose.msra.mxu0 0.0
    %418 = vmatprep.subr.mxu0 0.0
    %419 = vmatpush1.xpose.msra.mxu0 0.0
    %420 = vmatprep.subr.mxu0 0.0
    %421 = vmatpush1.xpose.msra.mxu0 0.0
    %422 = vmatprep.subr.mxu0 0.0
    %423 = vmatpush1.xpose.msra.mxu0 0.0
    %424 = vmatprep.subr.mxu0 0.0
    %425 = vmatpush1.xpose.msra.mxu0 0.0
    %426 = vmatprep.subr.mxu0 0.0
    %427 = vmatpush1.xpose.msra.mxu0 0.0
    %428 = vmatprep.subr.mxu0 0.0
    %429 = vmatpush1.xpose.msra.mxu0 0.0
    %430 = vmatprep.subr.mxu0 0.0
    %431 = vmatpush1.xpose.msra.mxu0 0.0
    %432 = vmatprep.subr.mxu0 0.0
    %433 = vmatpush1.xpose.msra.mxu0 0.0
    %434 = vmatprep.mubr.f32.mxu0 0.0
    %v435 = vand.u32 %v61, 4294901760
    %v436 = vsub.f32 %v61, %v435
    %v437 = vand.u32 %v436, 4294901760
    %438 = vmatmul.mubr.f32.gmra.mrb[0].mxu0 %v437
    %v439 = vpop.f32.mrb[0].mxu0
    %v440 = vadd.f32 %v344, %v439
    %v441 = vpop.f32.mrb[0].mxu0
    %442 = vmatprep.mubr.f32.mxu0 0.0
    %v443 = vand.u32 %v62, 4294901760
    %v444 = vsub.f32 %v62, %v443
    %v445 = vand.u32 %v444, 4294901760
    %446 = vmatmul.mubr.f32.gmra.mrb[0].mxu0 %v445
    %v447 = vpop.f32.mrb[0].mxu0
    %v448 = vadd.f32 %v351, %v447
    %v449 = vpop.f32.mrb[0].mxu0
    %450 = vmatprep.mubr.f32.mxu0 0.0
    %v451 = vand.u32 %v63, 4294901760
    %v452 = vsub.f32 %v63, %v451
    %v453 = vand.u32 %v452, 4294901760
    %454 = vmatmul.mubr.f32.gmra.mrb[0].mxu0 %v453
    %v455 = vpop.f32.mrb[0].mxu0
    %v456 = vadd.f32 %v358, %v455
    %v457 = vpop.f32.mrb[0].mxu0
    %458 = vmatprep.mubr.f32.mxu0 0.0
    %v459 = vand.u32 %v64, 4294901760
    %v460 = vsub.f32 %v64, %v459
    %v461 = vand.u32 %v460, 4294901760
    %462 = vmatmul.mubr.f32.gmra.mrb[0].mxu0 %v461
    %v463 = vpop.f32.mrb[0].mxu0
    %v464 = vadd.f32 %v365, %v463
    %v465 = vpop.f32.mrb[0].mxu0
    %466 = vdwg.mxu0
    %467 = vmatprep.subr.mxu0 0.0
    %v468 = vand.u32 %v57, 4294901760
    %v469 = vsub.f32 %v57, %v468
    %v470 = vand.u32 %v469, 4294901760
    %471 = vmatpush1.xpose.msra.mxu0 %v470
    %472 = vmatprep.subr.mxu0 0.0
    %v473 = vand.u32 %v58, 4294901760
    %v474 = vsub.f32 %v58, %v473
    %v475 = vand.u32 %v474, 4294901760
    %476 = vmatpush1.xpose.msra.mxu0 %v475
    %477 = vmatprep.subr.mxu0 0.0
    %478 = vmatpush1.xpose.msra.mxu0 0.0
    %479 = vmatprep.subr.mxu0 0.0
    %480 = vmatpush1.xpose.msra.mxu0 0.0
    %481 = vmatprep.subr.mxu0 0.0
    %482 = vmatpush1.xpose.msra.mxu0 0.0
    %483 = vmatprep.subr.mxu0 0.0
    %484 = vmatpush1.xpose.msra.mxu0 0.0
    %485 = vmatprep.subr.mxu0 0.0
    %486 = vmatpush1.xpose.msra.mxu0 0.0
    %487 = vmatprep.subr.mxu0 0.0
    %488 = vmatpush1.xpose.msra.mxu0 0.0
    %489 = vmatprep.subr.mxu0 0.0
    %490 = vmatpush1.xpose.msra.mxu0 0.0
    %491 = vmatprep.subr.mxu0 0.0
    %492 = vmatpush1.xpose.msra.mxu0 0.0
    %493 = vmatprep.subr.mxu0 0.0
    %494 = vmatpush1.xpose.msra.mxu0 0.0
    %495 = vmatprep.subr.mxu0 0.0
    %496 = vmatpush1.xpose.msra.mxu0 0.0
    %497 = vmatprep.subr.mxu0 0.0
    %498 = vmatpush1.xpose.msra.mxu0 0.0
    %499 = vmatprep.subr.mxu0 0.0
    %500 = vmatpush1.xpose.msra.mxu0 0.0
    %501 = vmatprep.subr.mxu0 0.0
    %502 = vmatpush1.xpose.msra.mxu0 0.0
    %503 = vmatprep.subr.mxu0 0.0
    %504 = vmatpush1.xpose.msra.mxu0 0.0
    %505 = vmatprep.subr.mxu0 0.0
    %506 = vmatpush1.xpose.msra.mxu0 0.0
    %507 = vmatprep.subr.mxu0 0.0
    %508 = vmatpush1.xpose.msra.mxu0 0.0
    %509 = vmatprep.subr.mxu0 0.0
    %510 = vmatpush1.xpose.msra.mxu0 0.0
    %511 = vmatprep.subr.mxu0 0.0
    %512 = vmatpush1.xpose.msra.mxu0 0.0
    %513 = vmatprep.subr.mxu0 0.0
    %514 = vmatpush1.xpose.msra.mxu0 0.0
    %515 = vmatprep.subr.mxu0 0.0
    %516 = vmatpush1.xpose.msra.mxu0 0.0
    %517 = vmatprep.subr.mxu0 0.0
    %518 = vmatpush1.xpose.msra.mxu0 0.0
    %519 = vmatprep.subr.mxu0 0.0
    %520 = vmatpush1.xpose.msra.mxu0 0.0
    %521 = vmatprep.subr.mxu0 0.0
    %522 = vmatpush1.xpose.msra.mxu0 0.0
    %523 = vmatprep.subr.mxu0 0.0
    %524 = vmatpush1.xpose.msra.mxu0 0.0
    %525 = vmatprep.subr.mxu0 0.0
    %526 = vmatpush1.xpose.msra.mxu0 0.0
    %527 = vmatprep.subr.mxu0 0.0
    %528 = vmatpush1.xpose.msra.mxu0 0.0
    %529 = vmatprep.subr.mxu0 0.0
    %530 = vmatpush1.xpose.msra.mxu0 0.0
    %531 = vmatprep.subr.mxu0 0.0
    %532 = vmatpush1.xpose.msra.mxu0 0.0
    %533 = vmatprep.subr.mxu0 0.0
    %534 = vmatpush1.xpose.msra.mxu0 0.0
    %535 = vmatprep.subr.mxu0 0.0
    %536 = vmatpush1.xpose.msra.mxu0 0.0
    %537 = vmatprep.mubr.f32.mxu0 0.0
    %v538 = vand.u32 %v61, 4294901760
    %539 = vmatmul.mubr.f32.gmra.mrb[0].mxu0 %v538
    %v540 = vpop.f32.mrb[0].mxu0
    %v541 = vadd.f32 %v440, %v540
    %v542 = vpop.f32.mrb[0].mxu0
    %543 = vmatprep.mubr.f32.mxu0 0.0
    %v544 = vand.u32 %v62, 4294901760
    %545 = vmatmul.mubr.f32.gmra.mrb[0].mxu0 %v544
    %v546 = vpop.f32.mrb[0].mxu0
    %v547 = vadd.f32 %v448, %v546
    %v548 = vpop.f32.mrb[0].mxu0
    %549 = vmatprep.mubr.f32.mxu0 0.0
    %v550 = vand.u32 %v63, 4294901760
    %551 = vmatmul.mubr.f32.gmra.mrb[0].mxu0 %v550
    %v552 = vpop.f32.mrb[0].mxu0
    %v553 = vadd.f32 %v456, %v552
    %v554 = vpop.f32.mrb[0].mxu0
    %555 = vmatprep.mubr.f32.mxu0 0.0
    %v556 = vand.u32 %v64, 4294901760
    %557 = vmatmul.mubr.f32.gmra.mrb[0].mxu0 %v556
    %v558 = vpop.f32.mrb[0].mxu0
    %v559 = vadd.f32 %v464, %v558
    %v560 = vpop.f32.mrb[0].mxu0
    %561 = vdwg.mxu0
    %562 = vmatprep.subr.mxu0 0.0
    %v563 = vand.u32 %v57, 4294901760
    %564 = vmatpush1.xpose.msra.mxu0 %v563
    %565 = vmatprep.subr.mxu0 0.0
    %v566 = vand.u32 %v58, 4294901760
    %567 = vmatpush1.xpose.msra.mxu0 %v566
    %568 = vmatprep.subr.mxu0 0.0
    %569 = vmatpush1.xpose.msra.mxu0 0.0
    %570 = vmatprep.subr.mxu0 0.0
    %571 = vmatpush1.xpose.msra.mxu0 0.0
    %572 = vmatprep.subr.mxu0 0.0
    %573 = vmatpush1.xpose.msra.mxu0 0.0
    %574 = vmatprep.subr.mxu0 0.0
    %575 = vmatpush1.xpose.msra.mxu0 0.0
    %576 = vmatprep.subr.mxu0 0.0
    %577 = vmatpush1.xpose.msra.mxu0 0.0
    %578 = vmatprep.subr.mxu0 0.0
    %579 = vmatpush1.xpose.msra.mxu0 0.0
    %580 = vmatprep.subr.mxu0 0.0
    %581 = vmatpush1.xpose.msra.mxu0 0.0
    %582 = vmatprep.subr.mxu0 0.0
    %583 = vmatpush1.xpose.msra.mxu0 0.0
    %584 = vmatprep.subr.mxu0 0.0
    %585 = vmatpush1.xpose.msra.mxu0 0.0
    %586 = vmatprep.subr.mxu0 0.0
    %587 = vmatpush1.xpose.msra.mxu0 0.0
    %588 = vmatprep.subr.mxu0 0.0
    %589 = vmatpush1.xpose.msra.mxu0 0.0
    %590 = vmatprep.subr.mxu0 0.0
    %591 = vmatpush1.xpose.msra.mxu0 0.0
    %592 = vmatprep.subr.mxu0 0.0
    %593 = vmatpush1.xpose.msra.mxu0 0.0
    %594 = vmatprep.subr.mxu0 0.0
    %595 = vmatpush1.xpose.msra.mxu0 0.0
    %596 = vmatprep.subr.mxu0 0.0
    %597 = vmatpush1.xpose.msra.mxu0 0.0
    %598 = vmatprep.subr.mxu0 0.0
    %599 = vmatpush1.xpose.msra.mxu0 0.0
    %600 = vmatprep.subr.mxu0 0.0
    %601 = vmatpush1.xpose.msra.mxu0 0.0
    %602 = vmatprep.subr.mxu0 0.0
    %603 = vmatpush1.xpose.msra.mxu0 0.0
    %604 = vmatprep.subr.mxu0 0.0
    %605 = vmatpush1.xpose.msra.mxu0 0.0
    %606 = vmatprep.subr.mxu0 0.0
    %607 = vmatpush1.xpose.msra.mxu0 0.0
    %608 = vmatprep.subr.mxu0 0.0
    %609 = vmatpush1.xpose.msra.mxu0 0.0
    %610 = vmatprep.subr.mxu0 0.0
    %611 = vmatpush1.xpose.msra.mxu0 0.0
    %612 = vmatprep.subr.mxu0 0.0
    %613 = vmatpush1.xpose.msra.mxu0 0.0
    %614 = vmatprep.subr.mxu0 0.0
    %615 = vmatpush1.xpose.msra.mxu0 0.0
    %616 = vmatprep.subr.mxu0 0.0
    %617 = vmatpush1.xpose.msra.mxu0 0.0
    %618 = vmatprep.subr.mxu0 0.0
    %619 = vmatpush1.xpose.msra.mxu0 0.0
    %620 = vmatprep.subr.mxu0 0.0
    %621 = vmatpush1.xpose.msra.mxu0 0.0
    %622 = vmatprep.subr.mxu0 0.0
    %623 = vmatpush1.xpose.msra.mxu0 0.0
    %624 = vmatprep.subr.mxu0 0.0
    %625 = vmatpush1.xpose.msra.mxu0 0.0
    %626 = vmatprep.subr.mxu0 0.0
    %627 = vmatpush1.xpose.msra.mxu0 0.0
    %628 = vmatprep.mubr.f32.mxu0 0.0
    %v629 = vand.u32 %v61, 4294901760
    %630 = vmatmul.mubr.f32.gmra.mrb[0].mxu0 %v629
    %v631 = vpop.f32.mrb[0].mxu0
    %v632 = vadd.f32 %v541, %v631
    %v633 = vpop.f32.mrb[0].mxu0
    %634 = vmatprep.mubr.f32.mxu0 0.0
    %v635 = vand.u32 %v62, 4294901760
    %636 = vmatmul.mubr.f32.gmra.mrb[0].mxu0 %v635
    %v637 = vpop.f32.mrb[0].mxu0
    %v638 = vadd.f32 %v547, %v637
    %v639 = vpop.f32.mrb[0].mxu0
    %640 = vmatprep.mubr.f32.mxu0 0.0
    %v641 = vand.u32 %v63, 4294901760
    %642 = vmatmul.mubr.f32.gmra.mrb[0].mxu0 %v641
    %v643 = vpop.f32.mrb[0].mxu0
    %v644 = vadd.f32 %v553, %v643
    %v645 = vpop.f32.mrb[0].mxu0
    %646 = vmatprep.mubr.f32.mxu0 0.0
    %v647 = vand.u32 %v64, 4294901760
    %648 = vmatmul.mubr.f32.gmra.mrb[0].mxu0 %v647
    %v649 = vpop.f32.mrb[0].mxu0
    %v650 = vadd.f32 %v559, %v649
    %v651 = vpop.f32.mrb[0].mxu0
    %652 = vdwg.mxu0
    %v653 = vmul.f32 %v632, 9.090909
    %v654 = vmul.f32 %v638, 9.090909
    %v655 = vmul.f32 %v644, 9.090909
    %v656 = vmul.f32 %v650, 9.090909
    %vm657 = vcmask 130048
    %v658 = vsel %vm657, %v653, -inf
    %v659 = vsel %vm657, %v654, -inf
    %v660 = vmax.f32 %v658, %v659
    %v661 = vrot.slane %v660, 4
    %v662 = vmax.f32 %v660, %v661
    %v663 = vrot.slane %v662, 2
    %v664 = vmax.f32 %v662, %v663
    %v665 = vrot.slane %v664, 1
    %v666 = vmax.f32 %v664, %v665
    %v667 = vsel %vm657, %v655, -inf
    %v668 = vsel %vm657, %v656, -inf
    %v669 = vmax.f32 %v667, %v668
    %v670 = vrot.slane %v669, 4
    %v671 = vmax.f32 %v669, %v670
    %v672 = vrot.slane %v671, 2
    %v673 = vmax.f32 %v671, %v672
    %v674 = vrot.slane %v673, 1
    %v675 = vmax.f32 %v673, %v674
    %v676 = vsub.f32 %v653, %v666
    %v677 = vsub.f32 %v654, %v666
    %v678 = vsub.f32 %v655, %v675
    %v679 = vsub.f32 %v656, %v675
    %v680 = vmul.f32 %v676, 1.442695
    %v681 = vpow.pop %v680
    %v682 = vmul.f32 %v677, 1.442695
    %v683 = vpow.pop %v682
    %v684 = vmul.f32 %v678, 1.442695
    %v685 = vpow.pop %v684
    %v686 = vmul.f32 %v679, 1.442695
    %v687 = vpow.pop %v686
    %v688 = vpack.c.bf16 %v683, %v681
    %v689 = vpack.c.bf16 %v687, %v685
    %v690 = vpack.c.bf16 %v62, %v61
    %v691 = vpack.c.bf16 %v64, %v63
    %692 = vxpose.xlu0.c.b16.start [1/8] %v688, 128
    %693 = vxpose.xlu0.c.b16.cont [2/8] 0, 128
    %694 = vxpose.xlu0.c.b16.cont [3/8] 0, 128
    %695 = vxpose.xlu0.c.b16.cont [4/8] 0, 128
    %696 = vxpose.xlu0.c.b16.cont [5/8] 0, 128
    %697 = vxpose.xlu0.c.b16.cont [6/8] 0, 128
    %698 = vxpose.xlu0.c.b16.cont [7/8] 0, 128
    %699 = vxpose.xlu0.c.b16.end [8/8] 0, 128
    %v700 = vpop.trf.xlu0
    %v701 = vpop.trf.xlu0
    %v702 = vpop.trf.xlu0
    %v703 = vpop.trf.xlu0
    %v704 = vpop.trf.xlu0
    %v705 = vpop.trf.xlu0
    %v706 = vpop.trf.xlu0
    %v707 = vpop.trf.xlu0
    %v709 = vsel %vm657, %v700, 0
    %711 = vmatprep.subr.bf16.mxu0 0
    %712 = vmatpush1.bf16.msra.mxu0 %v690
    %713 = vmatprep.subr.bf16.mxu0 0
    %714 = vmatpush1.bf16.msra.mxu0 0
    %715 = vmatprep.subr.bf16.mxu0 0
    %716 = vmatpush1.bf16.msra.mxu0 0
    %717 = vmatprep.subr.bf16.mxu0 0
    %718 = vmatpush1.bf16.msra.mxu0 0
    %719 = vmatprep.subr.bf16.mxu0 0
    %720 = vmatpush1.bf16.msra.mxu0 0
    %721 = vmatprep.subr.bf16.mxu0 0
    %722 = vmatpush1.bf16.msra.mxu0 0
    %723 = vmatprep.subr.bf16.mxu0 0
    %724 = vmatpush1.bf16.msra.mxu0 0
    %725 = vmatprep.subr.bf16.mxu0 0
    %726 = vmatpush1.bf16.msra.mxu0 0
    %727 = vmatprep.subr.bf16.mxu0 0
    %728 = vmatpush1.bf16.msra.mxu0 0
    %729 = vmatprep.subr.bf16.mxu0 0
    %730 = vmatpush1.bf16.msra.mxu0 0
    %731 = vmatprep.subr.bf16.mxu0 0
    %732 = vmatpush1.bf16.msra.mxu0 0
    %733 = vmatprep.subr.bf16.mxu0 0
    %734 = vmatpush1.bf16.msra.mxu0 0
    %735 = vmatprep.subr.bf16.mxu0 0
    %736 = vmatpush1.bf16.msra.mxu0 0
    %737 = vmatprep.subr.bf16.mxu0 0
    %738 = vmatpush1.bf16.msra.mxu0 0
    %739 = vmatprep.subr.bf16.mxu0 0
    %740 = vmatpush1.bf16.msra.mxu0 0
    %741 = vmatprep.subr.bf16.mxu0 0
    %742 = vmatpush1.bf16.msra.mxu0 0
    %743 = vmatprep.mubr.bf16.mxu0 0
    %744 = vmatmul.mubr.bf16.gmra.mrb[0].mxu0 %v709
    %v745 = vpop.f32.mrb[0].mxu0
    %v746 = vadd.f32 0.0, %v745
    %v747 = vpop.f32.mrb[0].mxu0
    %v748 = vpop.f32.mrb[0].mxu0
    %v749 = vadd.f32 0.0, %v748
    %v750 = vpop.f32.mrb[0].mxu0
    %751 = vdwg.mxu0
    %752 = vxpose.xlu0.c.b16.start [1/8] %v689, 128
    %753 = vxpose.xlu0.c.b16.cont [2/8] 0, 128
    %754 = vxpose.xlu0.c.b16.cont [3/8] 0, 128
    %755 = vxpose.xlu0.c.b16.cont [4/8] 0, 128
    %756 = vxpose.xlu0.c.b16.cont [5/8] 0, 128
    %757 = vxpose.xlu0.c.b16.cont [6/8] 0, 128
    %758 = vxpose.xlu0.c.b16.cont [7/8] 0, 128
    %759 = vxpose.xlu0.c.b16.end [8/8] 0, 128
    %v760 = vpop.trf.xlu0
    %v761 = vpop.trf.xlu0
    %v762 = vpop.trf.xlu0
    %v763 = vpop.trf.xlu0
    %v764 = vpop.trf.xlu0
    %v765 = vpop.trf.xlu0
    %v766 = vpop.trf.xlu0
    %v767 = vpop.trf.xlu0
    %v769 = vsel %vm657, %v760, 0
    %771 = vmatprep.subr.bf16.mxu0 0
    %772 = vmatpush1.bf16.msra.mxu0 %v691
    %773 = vmatprep.subr.bf16.mxu0 0
    %774 = vmatpush1.bf16.msra.mxu0 0
    %775 = vmatprep.subr.bf16.mxu0 0
    %776 = vmatpush1.bf16.msra.mxu0 0
    %777 = vmatprep.subr.bf16.mxu0 0
    %778 = vmatpush1.bf16.msra.mxu0 0
    %779 = vmatprep.subr.bf16.mxu0 0
    %780 = vmatpush1.bf16.msra.mxu0 0
    %781 = vmatprep.subr.bf16.mxu0 0
    %782 = vmatpush1.bf16.msra.mxu0 0
    %783 = vmatprep.subr.bf16.mxu0 0
    %784 = vmatpush1.bf16.msra.mxu0 0
    %785 = vmatprep.subr.bf16.mxu0 0
    %786 = vmatpush1.bf16.msra.mxu0 0
    %787 = vmatprep.subr.bf16.mxu0 0
    %788 = vmatpush1.bf16.msra.mxu0 0
    %789 = vmatprep.subr.bf16.mxu0 0
    %790 = vmatpush1.bf16.msra.mxu0 0
    %791 = vmatprep.subr.bf16.mxu0 0
    %792 = vmatpush1.bf16.msra.mxu0 0
    %793 = vmatprep.subr.bf16.mxu0 0
    %794 = vmatpush1.bf16.msra.mxu0 0
    %795 = vmatprep.subr.bf16.mxu0 0
    %796 = vmatpush1.bf16.msra.mxu0 0
    %797 = vmatprep.subr.bf16.mxu0 0
    %798 = vmatpush1.bf16.msra.mxu0 0
    %799 = vmatprep.subr.bf16.mxu0 0
    %800 = vmatpush1.bf16.msra.mxu0 0
    %801 = vmatprep.subr.bf16.mxu0 0
    %802 = vmatpush1.bf16.msra.mxu0 0
    %803 = vmatprep.mubr.bf16.mxu0 0
    %804 = vmatmul.mubr.bf16.gmra.mrb[0].mxu0 %v769
    %v805 = vpop.f32.mrb[0].mxu0
    %v806 = vadd.f32 0.0, %v805
    %v807 = vpop.f32.mrb[0].mxu0
    %v808 = vpop.f32.mrb[0].mxu0
    %v809 = vadd.f32 0.0, %v808
    %v810 = vpop.f32.mrb[0].mxu0
    %811 = vdwg.mxu0
    %v812 = vmul.f32 %v746, %v746
    %v813 = vmul.f32 %v749, %v749
    %v814 = vmul.f32 %v806, %v806
    %v815 = vmul.f32 %v809, %v809
    %816 = vadd.xlane.f32.xlu0 %v812
    %v817 = vpop.xlane.xlu0 %816
    %818 = vadd.xlane.f32.xlu0 %v813
    %v819 = vpop.xlane.xlu0 %818
    %820 = vadd.xlane.f32.xlu0 %v814
    %v821 = vpop.xlane.xlu0 %820
    %822 = vadd.xlane.f32.xlu0 %v815
    %v823 = vpop.xlane.xlu0 %822
    %v824 = vmax.f32 %v817, 1e-24
    %v825 = vmax.f32 %v819, 1e-24
    %v826 = vmax.f32 %v821, 1e-24
    %v827 = vmax.f32 %v823, 1e-24
    %v828 = vrsqrt.pop %v824
    %v829 = vrsqrt.pop %v825
    %v830 = vrsqrt.pop %v826
    %v831 = vrsqrt.pop %v827
    %v832 = vmul.f32 %v746, %v59
    %v833 = vmul.f32 %v749, %v60
    %v834 = vmul.f32 %v806, %v59
    %v835 = vmul.f32 %v809, %v60
    %836 = vadd.xlane.f32.xlu0 %v832
    %v837 = vpop.xlane.xlu0 %836
    %838 = vadd.xlane.f32.xlu0 %v833
    %v839 = vpop.xlane.xlu0 %838
    %840 = vadd.xlane.f32.xlu0 %v834
    %v841 = vpop.xlane.xlu0 %840
    %842 = vadd.xlane.f32.xlu0 %v835
    %v843 = vpop.xlane.xlu0 %842
    %v844 = vmul.f32 %v837, %v828
    %v845 = vmul.f32 %v839, %v829
    %v846 = vmul.f32 %v841, %v830
    %v847 = vmul.f32 %v843, %v831
    %v848 = vlaneseq
    %v849 = vand.u32 %v848, 127
    %v850 = vlaneseq
    %v851 = vshrl.u32 %v850, 7
    %v852 = vmul.u32 %v851, 8
    %vm853 = vcmp.ge.s32.totalorder %v849, %v852
    %v854 = vadd.s32 %v852, 8
    %vm855 = vcmp.lt.s32.totalorder %v849, %v854
    %vm856 = vmand %vm853, %vm855
    %v857 = vsel %vm856, 1, 0
    %v858 = vcvt.s32.f32 %v857
    %v863 = vlaneseq
    %v864 = vshrl.u32 %v863, 7
    %v865 = vsub.s32 %v849, %v864
    %v866 = vrot.slane %v844, %v865
    %v867 = vadd.s32 %v849, 4294967288
    %v868 = vlaneseq
    %v869 = vshrl.u32 %v868, 7
    %v870 = vsub.s32 %v867, %v869
    %v871 = vrot.slane %v845, %v870
    %vm872 = vcmask 130112
    %v873 = vsel %vm872, %v871, %v866
    %v874 = vlaneseq
    %v875 = vshrl.u32 %v874, 7
    %v876 = vsub.s32 %v849, %v875
    %v877 = vrot.slane %v846, %v876
    %v878 = vlaneseq
    %v879 = vshrl.u32 %v878, 7
    %v880 = vsub.s32 %v867, %v879
    %v881 = vrot.slane %v847, %v880
    %v882 = vsel %vm872, %v881, %v877
    %vm883 = vcmask 1041409
    %v884 = vsel %vm883, %v882, %v873
    %v886 = vsel %vm657, %v858, 0
    %v888 = vsel %vm657, %v884, 0
    %890 = vmatprep.subr.mxu0 0.0
    %v891 = vand.u32 %v888, 4294901760
    %892 = vmatpush1.xpose.msra.mxu0 %v891
    %893 = vmatprep.subr.mxu0 0.0
    %894 = vmatpush1.xpose.msra.mxu0 0.0
    %895 = vmatprep.subr.mxu0 0.0
    %896 = vmatpush1.xpose.msra.mxu0 0.0
    %897 = vmatprep.subr.mxu0 0.0
    %898 = vmatpush1.xpose.msra.mxu0 0.0
    %899 = vmatprep.subr.mxu0 0.0
    %900 = vmatpush1.xpose.msra.mxu0 0.0
    %901 = vmatprep.subr.mxu0 0.0
    %902 = vmatpush1.xpose.msra.mxu0 0.0
    %903 = vmatprep.subr.mxu0 0.0
    %904 = vmatpush1.xpose.msra.mxu0 0.0
    %905 = vmatprep.subr.mxu0 0.0
    %906 = vmatpush1.xpose.msra.mxu0 0.0
    %907 = vmatprep.subr.mxu0 0.0
    %908 = vmatpush1.xpose.msra.mxu0 0.0
    %909 = vmatprep.subr.mxu0 0.0
    %910 = vmatpush1.xpose.msra.mxu0 0.0
    %911 = vmatprep.subr.mxu0 0.0
    %912 = vmatpush1.xpose.msra.mxu0 0.0
    %913 = vmatprep.subr.mxu0 0.0
    %914 = vmatpush1.xpose.msra.mxu0 0.0
    %915 = vmatprep.subr.mxu0 0.0
    %916 = vmatpush1.xpose.msra.mxu0 0.0
    %917 = vmatprep.subr.mxu0 0.0
    %918 = vmatpush1.xpose.msra.mxu0 0.0
    %919 = vmatprep.subr.mxu0 0.0
    %920 = vmatpush1.xpose.msra.mxu0 0.0
    %921 = vmatprep.subr.mxu0 0.0
    %922 = vmatpush1.xpose.msra.mxu0 0.0
    %923 = vmatprep.subr.mxu0 0.0
    %924 = vmatpush1.xpose.msra.mxu0 0.0
    %925 = vmatprep.subr.mxu0 0.0
    %926 = vmatpush1.xpose.msra.mxu0 0.0
    %927 = vmatprep.subr.mxu0 0.0
    %928 = vmatpush1.xpose.msra.mxu0 0.0
    %929 = vmatprep.subr.mxu0 0.0
    %930 = vmatpush1.xpose.msra.mxu0 0.0
    %931 = vmatprep.subr.mxu0 0.0
    %932 = vmatpush1.xpose.msra.mxu0 0.0
    %933 = vmatprep.subr.mxu0 0.0
    %934 = vmatpush1.xpose.msra.mxu0 0.0
    %935 = vmatprep.subr.mxu0 0.0
    %936 = vmatpush1.xpose.msra.mxu0 0.0
    %937 = vmatprep.subr.mxu0 0.0
    %938 = vmatpush1.xpose.msra.mxu0 0.0
    %939 = vmatprep.subr.mxu0 0.0
    %940 = vmatpush1.xpose.msra.mxu0 0.0
    %941 = vmatprep.subr.mxu0 0.0
    %942 = vmatpush1.xpose.msra.mxu0 0.0
    %943 = vmatprep.subr.mxu0 0.0
    %944 = vmatpush1.xpose.msra.mxu0 0.0
    %945 = vmatprep.subr.mxu0 0.0
    %946 = vmatpush1.xpose.msra.mxu0 0.0
    %947 = vmatprep.subr.mxu0 0.0
    %948 = vmatpush1.xpose.msra.mxu0 0.0
    %949 = vmatprep.subr.mxu0 0.0
    %950 = vmatpush1.xpose.msra.mxu0 0.0
    %951 = vmatprep.subr.mxu0 0.0
    %952 = vmatpush1.xpose.msra.mxu0 0.0
    %953 = vmatprep.subr.mxu0 0.0
    %954 = vmatpush1.xpose.msra.mxu0 0.0
    %955 = vmatprep.mubr.f32.mxu0 0.0
    %v956 = vand.u32 %v886, 4294901760
    %v957 = vsub.f32 %v886, %v956
    %v958 = vand.u32 %v957, 4294901760
    %v959 = vsub.f32 %v957, %v958
    %v960 = vand.u32 %v959, 4294901760
    %961 = vmatmul.mubr.f32.gmra.mrb[0].mxu0 %v960
    %v962 = vpop.f32.mrb[0].mxu0
    %v963 = vadd.f32 0.0, %v962
    %v964 = vpop.f32.mrb[0].mxu0
    %965 = vdwg.mxu0
    %966 = vmatprep.subr.mxu0 0.0
    %v967 = vand.u32 %v888, 4294901760
    %v968 = vsub.f32 %v888, %v967
    %v969 = vand.u32 %v968, 4294901760
    %v970 = vsub.f32 %v968, %v969
    %v971 = vand.u32 %v970, 4294901760
    %972 = vmatpush1.xpose.msra.mxu0 %v971
    %973 = vmatprep.subr.mxu0 0.0
    %974 = vmatpush1.xpose.msra.mxu0 0.0
    %975 = vmatprep.subr.mxu0 0.0
    %976 = vmatpush1.xpose.msra.mxu0 0.0
    %977 = vmatprep.subr.mxu0 0.0
    %978 = vmatpush1.xpose.msra.mxu0 0.0
    %979 = vmatprep.subr.mxu0 0.0
    %980 = vmatpush1.xpose.msra.mxu0 0.0
    %981 = vmatprep.subr.mxu0 0.0
    %982 = vmatpush1.xpose.msra.mxu0 0.0
    %983 = vmatprep.subr.mxu0 0.0
    %984 = vmatpush1.xpose.msra.mxu0 0.0
    %985 = vmatprep.subr.mxu0 0.0
    %986 = vmatpush1.xpose.msra.mxu0 0.0
    %987 = vmatprep.subr.mxu0 0.0
    %988 = vmatpush1.xpose.msra.mxu0 0.0
    %989 = vmatprep.subr.mxu0 0.0
    %990 = vmatpush1.xpose.msra.mxu0 0.0
    %991 = vmatprep.subr.mxu0 0.0
    %992 = vmatpush1.xpose.msra.mxu0 0.0
    %993 = vmatprep.subr.mxu0 0.0
    %994 = vmatpush1.xpose.msra.mxu0 0.0
    %995 = vmatprep.subr.mxu0 0.0
    %996 = vmatpush1.xpose.msra.mxu0 0.0
    %997 = vmatprep.subr.mxu0 0.0
    %998 = vmatpush1.xpose.msra.mxu0 0.0
    %999 = vmatprep.subr.mxu0 0.0
    %1000 = vmatpush1.xpose.msra.mxu0 0.0
    %1001 = vmatprep.subr.mxu0 0.0
    %1002 = vmatpush1.xpose.msra.mxu0 0.0
    %1003 = vmatprep.subr.mxu0 0.0
    %1004 = vmatpush1.xpose.msra.mxu0 0.0
    %1005 = vmatprep.subr.mxu0 0.0
    %1006 = vmatpush1.xpose.msra.mxu0 0.0
    %1007 = vmatprep.subr.mxu0 0.0
    %1008 = vmatpush1.xpose.msra.mxu0 0.0
    %1009 = vmatprep.subr.mxu0 0.0
    %1010 = vmatpush1.xpose.msra.mxu0 0.0
    %1011 = vmatprep.subr.mxu0 0.0
    %1012 = vmatpush1.xpose.msra.mxu0 0.0
    %1013 = vmatprep.subr.mxu0 0.0
    %1014 = vmatpush1.xpose.msra.mxu0 0.0
    %1015 = vmatprep.subr.mxu0 0.0
    %1016 = vmatpush1.xpose.msra.mxu0 0.0
    %1017 = vmatprep.subr.mxu0 0.0
    %1018 = vmatpush1.xpose.msra.mxu0 0.0
    %1019 = vmatprep.subr.mxu0 0.0
    %1020 = vmatpush1.xpose.msra.mxu0 0.0
    %1021 = vmatprep.subr.mxu0 0.0
    %1022 = vmatpush1.xpose.msra.mxu0 0.0
    %1023 = vmatprep.subr.mxu0 0.0
    %1024 = vmatpush1.xpose.msra.mxu0 0.0
    %1025 = vmatprep.subr.mxu0 0.0
    %1026 = vmatpush1.xpose.msra.mxu0 0.0
    %1027 = vmatprep.subr.mxu0 0.0
    %1028 = vmatpush1.xpose.msra.mxu0 0.0
    %1029 = vmatprep.subr.mxu0 0.0
    %1030 = vmatpush1.xpose.msra.mxu0 0.0
    %1031 = vmatprep.subr.mxu0 0.0
    %1032 = vmatpush1.xpose.msra.mxu0 0.0
    %1033 = vmatprep.subr.mxu0 0.0
    %1034 = vmatpush1.xpose.msra.mxu0 0.0
    %1035 = vmatprep.mubr.f32.mxu0 0.0
    %v1036 = vand.u32 %v886, 4294901760
    %1037 = vmatmul.mubr.f32.gmra.mrb[0].mxu0 %v1036
    %v1038 = vpop.f32.mrb[0].mxu0
    %v1039 = vadd.f32 %v963, %v1038
    %v1040 = vpop.f32.mrb[0].mxu0
    %1041 = vdwg.mxu0
    %1042 = vmatprep.subr.mxu0 0.0
    %v1043 = vand.u32 %v888, 4294901760
    %v1044 = vsub.f32 %v888, %v1043
    %1045 = vmatpush1.xpose.msra.mxu0 %v1044
    %1046 = vmatprep.subr.mxu0 0.0
    %1047 = vmatpush1.xpose.msra.mxu0 0.0
    %1048 = vmatprep.subr.mxu0 0.0
    %1049 = vmatpush1.xpose.msra.mxu0 0.0
    %1050 = vmatprep.subr.mxu0 0.0
    %1051 = vmatpush1.xpose.msra.mxu0 0.0
    %1052 = vmatprep.subr.mxu0 0.0
    %1053 = vmatpush1.xpose.msra.mxu0 0.0
    %1054 = vmatprep.subr.mxu0 0.0
    %1055 = vmatpush1.xpose.msra.mxu0 0.0
    %1056 = vmatprep.subr.mxu0 0.0
    %1057 = vmatpush1.xpose.msra.mxu0 0.0
    %1058 = vmatprep.subr.mxu0 0.0
    %1059 = vmatpush1.xpose.msra.mxu0 0.0
    %1060 = vmatprep.subr.mxu0 0.0
    %1061 = vmatpush1.xpose.msra.mxu0 0.0
    %1062 = vmatprep.subr.mxu0 0.0
    %1063 = vmatpush1.xpose.msra.mxu0 0.0
    %1064 = vmatprep.subr.mxu0 0.0
    %1065 = vmatpush1.xpose.msra.mxu0 0.0
    %1066 = vmatprep.subr.mxu0 0.0
    %1067 = vmatpush1.xpose.msra.mxu0 0.0
    %1068 = vmatprep.subr.mxu0 0.0
    %1069 = vmatpush1.xpose.msra.mxu0 0.0
    %1070 = vmatprep.subr.mxu0 0.0
    %1071 = vmatpush1.xpose.msra.mxu0 0.0
    %1072 = vmatprep.subr.mxu0 0.0
    %1073 = vmatpush1.xpose.msra.mxu0 0.0
    %1074 = vmatprep.subr.mxu0 0.0
    %1075 = vmatpush1.xpose.msra.mxu0 0.0
    %1076 = vmatprep.subr.mxu0 0.0
    %1077 = vmatpush1.xpose.msra.mxu0 0.0
    %1078 = vmatprep.subr.mxu0 0.0
    %1079 = vmatpush1.xpose.msra.mxu0 0.0
    %1080 = vmatprep.subr.mxu0 0.0
    %1081 = vmatpush1.xpose.msra.mxu0 0.0
    %1082 = vmatprep.subr.mxu0 0.0
    %1083 = vmatpush1.xpose.msra.mxu0 0.0
    %1084 = vmatprep.subr.mxu0 0.0
    %1085 = vmatpush1.xpose.msra.mxu0 0.0
    %1086 = vmatprep.subr.mxu0 0.0
    %1087 = vmatpush1.xpose.msra.mxu0 0.0
    %1088 = vmatprep.subr.mxu0 0.0
    %1089 = vmatpush1.xpose.msra.mxu0 0.0
    %1090 = vmatprep.subr.mxu0 0.0
    %1091 = vmatpush1.xpose.msra.mxu0 0.0
    %1092 = vmatprep.subr.mxu0 0.0
    %1093 = vmatpush1.xpose.msra.mxu0 0.0
    %1094 = vmatprep.subr.mxu0 0.0
    %1095 = vmatpush1.xpose.msra.mxu0 0.0
    %1096 = vmatprep.subr.mxu0 0.0
    %1097 = vmatpush1.xpose.msra.mxu0 0.0
    %1098 = vmatprep.subr.mxu0 0.0
    %1099 = vmatpush1.xpose.msra.mxu0 0.0
    %1100 = vmatprep.subr.mxu0 0.0
    %1101 = vmatpush1.xpose.msra.mxu0 0.0
    %1102 = vmatprep.subr.mxu0 0.0
    %1103 = vmatpush1.xpose.msra.mxu0 0.0
    %1104 = vmatprep.subr.mxu0 0.0
    %1105 = vmatpush1.xpose.msra.mxu0 0.0
    %1106 = vmatprep.subr.mxu0 0.0
    %1107 = vmatpush1.xpose.msra.mxu0 0.0
    %1108 = vmatprep.mubr.f32.mxu0 0.0
    %v1109 = vand.u32 %v886, 4294901760
    %v1110 = vsub.f32 %v886, %v1109
    %1111 = vmatmul.mubr.f32.gmra.mrb[0].mxu0 %v1110
    %v1112 = vpop.f32.mrb[0].mxu0
    %v1113 = vadd.f32 %v1039, %v1112
    %v1114 = vpop.f32.mrb[0].mxu0
    %1115 = vdwg.mxu0
    %1116 = vmatprep.subr.mxu0 0.0
    %v1117 = vand.u32 %v888, 4294901760
    %1118 = vmatpush1.xpose.msra.mxu0 %v1117
    %1119 = vmatprep.subr.mxu0 0.0
    %1120 = vmatpush1.xpose.msra.mxu0 0.0
    %1121 = vmatprep.subr.mxu0 0.0
    %1122 = vmatpush1.xpose.msra.mxu0 0.0
    %1123 = vmatprep.subr.mxu0 0.0
    %1124 = vmatpush1.xpose.msra.mxu0 0.0
    %1125 = vmatprep.subr.mxu0 0.0
    %1126 = vmatpush1.xpose.msra.mxu0 0.0
    %1127 = vmatprep.subr.mxu0 0.0
    %1128 = vmatpush1.xpose.msra.mxu0 0.0
    %1129 = vmatprep.subr.mxu0 0.0
    %1130 = vmatpush1.xpose.msra.mxu0 0.0
    %1131 = vmatprep.subr.mxu0 0.0
    %1132 = vmatpush1.xpose.msra.mxu0 0.0
    %1133 = vmatprep.subr.mxu0 0.0
    %1134 = vmatpush1.xpose.msra.mxu0 0.0
    %1135 = vmatprep.subr.mxu0 0.0
    %1136 = vmatpush1.xpose.msra.mxu0 0.0
    %1137 = vmatprep.subr.mxu0 0.0
    %1138 = vmatpush1.xpose.msra.mxu0 0.0
    %1139 = vmatprep.subr.mxu0 0.0
    %1140 = vmatpush1.xpose.msra.mxu0 0.0
    %1141 = vmatprep.subr.mxu0 0.0
    %1142 = vmatpush1.xpose.msra.mxu0 0.0
    %1143 = vmatprep.subr.mxu0 0.0
    %1144 = vmatpush1.xpose.msra.mxu0 0.0
    %1145 = vmatprep.subr.mxu0 0.0
    %1146 = vmatpush1.xpose.msra.mxu0 0.0
    %1147 = vmatprep.subr.mxu0 0.0
    %1148 = vmatpush1.xpose.msra.mxu0 0.0
    %1149 = vmatprep.subr.mxu0 0.0
    %1150 = vmatpush1.xpose.msra.mxu0 0.0
    %1151 = vmatprep.subr.mxu0 0.0
    %1152 = vmatpush1.xpose.msra.mxu0 0.0
    %1153 = vmatprep.subr.mxu0 0.0
    %1154 = vmatpush1.xpose.msra.mxu0 0.0
    %1155 = vmatprep.subr.mxu0 0.0
    %1156 = vmatpush1.xpose.msra.mxu0 0.0
    %1157 = vmatprep.subr.mxu0 0.0
    %1158 = vmatpush1.xpose.msra.mxu0 0.0
    %1159 = vmatprep.subr.mxu0 0.0
    %1160 = vmatpush1.xpose.msra.mxu0 0.0
    %1161 = vmatprep.subr.mxu0 0.0
    %1162 = vmatpush1.xpose.msra.mxu0 0.0
    %1163 = vmatprep.subr.mxu0 0.0
    %1164 = vmatpush1.xpose.msra.mxu0 0.0
    %1165 = vmatprep.subr.mxu0 0.0
    %1166 = vmatpush1.xpose.msra.mxu0 0.0
    %1167 = vmatprep.subr.mxu0 0.0
    %1168 = vmatpush1.xpose.msra.mxu0 0.0
    %1169 = vmatprep.subr.mxu0 0.0
    %1170 = vmatpush1.xpose.msra.mxu0 0.0
    %1171 = vmatprep.subr.mxu0 0.0
    %1172 = vmatpush1.xpose.msra.mxu0 0.0
    %1173 = vmatprep.subr.mxu0 0.0
    %1174 = vmatpush1.xpose.msra.mxu0 0.0
    %1175 = vmatprep.subr.mxu0 0.0
    %1176 = vmatpush1.xpose.msra.mxu0 0.0
    %1177 = vmatprep.subr.mxu0 0.0
    %1178 = vmatpush1.xpose.msra.mxu0 0.0
    %1179 = vmatprep.subr.mxu0 0.0
    %1180 = vmatpush1.xpose.msra.mxu0 0.0
    %1181 = vmatprep.mubr.f32.mxu0 0.0
    %v1182 = vand.u32 %v886, 4294901760
    %v1183 = vsub.f32 %v886, %v1182
    %v1184 = vand.u32 %v1183, 4294901760
    %1185 = vmatmul.mubr.f32.gmra.mrb[0].mxu0 %v1184
    %v1186 = vpop.f32.mrb[0].mxu0
    %v1187 = vadd.f32 %v1113, %v1186
    %v1188 = vpop.f32.mrb[0].mxu0
    %1189 = vdwg.mxu0
    %1190 = vmatprep.subr.mxu0 0.0
    %v1191 = vand.u32 %v888, 4294901760
    %v1192 = vsub.f32 %v888, %v1191
    %v1193 = vand.u32 %v1192, 4294901760
    %1194 = vmatpush1.xpose.msra.mxu0 %v1193
    %1195 = vmatprep.subr.mxu0 0.0
    %1196 = vmatpush1.xpose.msra.mxu0 0.0
    %1197 = vmatprep.subr.mxu0 0.0
    %1198 = vmatpush1.xpose.msra.mxu0 0.0
    %1199 = vmatprep.subr.mxu0 0.0
    %1200 = vmatpush1.xpose.msra.mxu0 0.0
    %1201 = vmatprep.subr.mxu0 0.0
    %1202 = vmatpush1.xpose.msra.mxu0 0.0
    %1203 = vmatprep.subr.mxu0 0.0
    %1204 = vmatpush1.xpose.msra.mxu0 0.0
    %1205 = vmatprep.subr.mxu0 0.0
    %1206 = vmatpush1.xpose.msra.mxu0 0.0
    %1207 = vmatprep.subr.mxu0 0.0
    %1208 = vmatpush1.xpose.msra.mxu0 0.0
    %1209 = vmatprep.subr.mxu0 0.0
    %1210 = vmatpush1.xpose.msra.mxu0 0.0
    %1211 = vmatprep.subr.mxu0 0.0
    %1212 = vmatpush1.xpose.msra.mxu0 0.0
    %1213 = vmatprep.subr.mxu0 0.0
    %1214 = vmatpush1.xpose.msra.mxu0 0.0
    %1215 = vmatprep.subr.mxu0 0.0
    %1216 = vmatpush1.xpose.msra.mxu0 0.0
    %1217 = vmatprep.subr.mxu0 0.0
    %1218 = vmatpush1.xpose.msra.mxu0 0.0
    %1219 = vmatprep.subr.mxu0 0.0
    %1220 = vmatpush1.xpose.msra.mxu0 0.0
    %1221 = vmatprep.subr.mxu0 0.0
    %1222 = vmatpush1.xpose.msra.mxu0 0.0
    %1223 = vmatprep.subr.mxu0 0.0
    %1224 = vmatpush1.xpose.msra.mxu0 0.0
    %1225 = vmatprep.subr.mxu0 0.0
    %1226 = vmatpush1.xpose.msra.mxu0 0.0
    %1227 = vmatprep.subr.mxu0 0.0
    %1228 = vmatpush1.xpose.msra.mxu0 0.0
    %1229 = vmatprep.subr.mxu0 0.0
    %1230 = vmatpush1.xpose.msra.mxu0 0.0
    %1231 = vmatprep.subr.mxu0 0.0
    %1232 = vmatpush1.xpose.msra.mxu0 0.0
    %1233 = vmatprep.subr.mxu0 0.0
    %1234 = vmatpush1.xpose.msra.mxu0 0.0
    %1235 = vmatprep.subr.mxu0 0.0
    %1236 = vmatpush1.xpose.msra.mxu0 0.0
    %1237 = vmatprep.subr.mxu0 0.0
    %1238 = vmatpush1.xpose.msra.mxu0 0.0
    %1239 = vmatprep.subr.mxu0 0.0
    %1240 = vmatpush1.xpose.msra.mxu0 0.0
    %1241 = vmatprep.subr.mxu0 0.0
    %1242 = vmatpush1.xpose.msra.mxu0 0.0
    %1243 = vmatprep.subr.mxu0 0.0
    %1244 = vmatpush1.xpose.msra.mxu0 0.0
    %1245 = vmatprep.subr.mxu0 0.0
    %1246 = vmatpush1.xpose.msra.mxu0 0.0
    %1247 = vmatprep.subr.mxu0 0.0
    %1248 = vmatpush1.xpose.msra.mxu0 0.0
    %1249 = vmatprep.subr.mxu0 0.0
    %1250 = vmatpush1.xpose.msra.mxu0 0.0
    %1251 = vmatprep.subr.mxu0 0.0
    %1252 = vmatpush1.xpose.msra.mxu0 0.0
    %1253 = vmatprep.subr.mxu0 0.0
    %1254 = vmatpush1.xpose.msra.mxu0 0.0
    %1255 = vmatprep.subr.mxu0 0.0
    %1256 = vmatpush1.xpose.msra.mxu0 0.0
    %1257 = vmatprep.mubr.f32.mxu0 0.0
    %v1258 = vand.u32 %v886, 4294901760
    %1259 = vmatmul.mubr.f32.gmra.mrb[0].mxu0 %v1258
    %v1260 = vpop.f32.mrb[0].mxu0
    %v1261 = vadd.f32 %v1187, %v1260
    %v1262 = vpop.f32.mrb[0].mxu0
    %1263 = vdwg.mxu0
    %1264 = vmatprep.subr.mxu0 0.0
    %v1265 = vand.u32 %v888, 4294901760
    %1266 = vmatpush1.xpose.msra.mxu0 %v1265
    %1267 = vmatprep.subr.mxu0 0.0
    %1268 = vmatpush1.xpose.msra.mxu0 0.0
    %1269 = vmatprep.subr.mxu0 0.0
    %1270 = vmatpush1.xpose.msra.mxu0 0.0
    %1271 = vmatprep.subr.mxu0 0.0
    %1272 = vmatpush1.xpose.msra.mxu0 0.0
    %1273 = vmatprep.subr.mxu0 0.0
    %1274 = vmatpush1.xpose.msra.mxu0 0.0
    %1275 = vmatprep.subr.mxu0 0.0
    %1276 = vmatpush1.xpose.msra.mxu0 0.0
    %1277 = vmatprep.subr.mxu0 0.0
    %1278 = vmatpush1.xpose.msra.mxu0 0.0
    %1279 = vmatprep.subr.mxu0 0.0
    %1280 = vmatpush1.xpose.msra.mxu0 0.0
    %1281 = vmatprep.subr.mxu0 0.0
    %1282 = vmatpush1.xpose.msra.mxu0 0.0
    %1283 = vmatprep.subr.mxu0 0.0
    %1284 = vmatpush1.xpose.msra.mxu0 0.0
    %1285 = vmatprep.subr.mxu0 0.0
    %1286 = vmatpush1.xpose.msra.mxu0 0.0
    %1287 = vmatprep.subr.mxu0 0.0
    %1288 = vmatpush1.xpose.msra.mxu0 0.0
    %1289 = vmatprep.subr.mxu0 0.0
    %1290 = vmatpush1.xpose.msra.mxu0 0.0
    %1291 = vmatprep.subr.mxu0 0.0
    %1292 = vmatpush1.xpose.msra.mxu0 0.0
    %1293 = vmatprep.subr.mxu0 0.0
    %1294 = vmatpush1.xpose.msra.mxu0 0.0
    %1295 = vmatprep.subr.mxu0 0.0
    %1296 = vmatpush1.xpose.msra.mxu0 0.0
    %1297 = vmatprep.subr.mxu0 0.0
    %1298 = vmatpush1.xpose.msra.mxu0 0.0
    %1299 = vmatprep.subr.mxu0 0.0
    %1300 = vmatpush1.xpose.msra.mxu0 0.0
    %1301 = vmatprep.subr.mxu0 0.0
    %1302 = vmatpush1.xpose.msra.mxu0 0.0
    %1303 = vmatprep.subr.mxu0 0.0
    %1304 = vmatpush1.xpose.msra.mxu0 0.0
    %1305 = vmatprep.subr.mxu0 0.0
    %1306 = vmatpush1.xpose.msra.mxu0 0.0
    %1307 = vmatprep.subr.mxu0 0.0
    %1308 = vmatpush1.xpose.msra.mxu0 0.0
    %1309 = vmatprep.subr.mxu0 0.0
    %1310 = vmatpush1.xpose.msra.mxu0 0.0
    %1311 = vmatprep.subr.mxu0 0.0
    %1312 = vmatpush1.xpose.msra.mxu0 0.0
    %1313 = vmatprep.subr.mxu0 0.0
    %1314 = vmatpush1.xpose.msra.mxu0 0.0
    %1315 = vmatprep.subr.mxu0 0.0
    %1316 = vmatpush1.xpose.msra.mxu0 0.0
    %1317 = vmatprep.subr.mxu0 0.0
    %1318 = vmatpush1.xpose.msra.mxu0 0.0
    %1319 = vmatprep.subr.mxu0 0.0
    %1320 = vmatpush1.xpose.msra.mxu0 0.0
    %1321 = vmatprep.subr.mxu0 0.0
    %1322 = vmatpush1.xpose.msra.mxu0 0.0
    %1323 = vmatprep.subr.mxu0 0.0
    %1324 = vmatpush1.xpose.msra.mxu0 0.0
    %1325 = vmatprep.subr.mxu0 0.0
    %1326 = vmatpush1.xpose.msra.mxu0 0.0
    %1327 = vmatprep.subr.mxu0 0.0
    %1328 = vmatpush1.xpose.msra.mxu0 0.0
    %1329 = vmatprep.mubr.f32.mxu0 0.0
    %v1330 = vand.u32 %v886, 4294901760
    %1331 = vmatmul.mubr.f32.gmra.mrb[0].mxu0 %v1330
    %v1332 = vpop.f32.mrb[0].mxu0
    %v1333 = vadd.f32 %v1261, %v1332
    %v1334 = vpop.f32.mrb[0].mxu0
    %1335 = vdwg.mxu0
    %vm1336 = vcmask 9216
    %1337 = vst.msk [vmem:[#allocation8] sm:$0x3] %vm1336, %v1333
    // Predicated region
    $region26: #{tpu_custom_call.1} parent=1 // pred_check
      _
    $region27: #{tpu_custom_call.1} parent=1 // pred_check_branch
      %1339 = sbr.rel (0) target = $region29
    $region28: #{tpu_custom_call.1} parent=1 // pred_region
      %s1341 = ssub.s32 32, 32
      %1342 = vsyncadd [#allocation4], %s1341
      %s1344 = sshll.u32 [#allocation8], 4
      %s1345 = int_to_ptr.vmem [resolvable:$true] %s1344
      %1347 = dma.vmem_to_hbm [thread:$0]  %s1345, 32, %s3, [#allocation4]
    $region29: #{tpu_custom_call.1} parent=1 // pred_fallthru
      _
    // Predicated region
    $region30: #{tpu_custom_call.1} parent=1 // pred_check
      _
    $region31: #{tpu_custom_call.1} parent=1 // pred_check_branch
      %1349 = sbr.rel (0) target = $region33
    $region32: #{tpu_custom_call.1} parent=1 // pred_region
      %1350 = dma.done [#allocation4], 32
    $region33: #{tpu_custom_call.1} parent=1 // pred_fallthru
      _
    %1351 = vsyncpa [#allocation3], 1
    %1352 = vsyncpa [#allocation6], 1
    %1353 = vsyncpa [#allocation4], 1

</llo_original>
